<compile_context>
chip_gen: v5e
topology: v5e:2x2
jax: 0.10.0
libtpu: 0.0.40
codegen_flags: <defaults>
</compile_context>

<pallas_src>
import functools
import math

import jax
import jax.numpy as jnp
from jax import lax
from jax.experimental import pallas as pl
from jax.experimental.pallas import tpu as pltpu


# ------------------------------ helpers --------------------------------------


def _pick_tile(dim, candidates, align):
    """Largest candidate that divides `dim` and respects `align`; else the full
    dim (a block equal to the full array extent is always legal)."""
    for c in candidates:
        if c <= dim and dim % c == 0 and c % align == 0:
            return c
    return dim


_SQRT_HALF = 0.7071067811865476
_VMEM_BUDGET = 24 << 20          # working-set target; safe on v5e/v6e/v7x
_VMEM_LIMIT = 32 << 20           # scoped VMEM limit handed to Mosaic


def _erf(x):
    # TODO(synk): Mosaic has no guaranteed erf lowering; this is Abramowitz &
    # Stegun 7.1.26 (|err| < 1.5e-7), built only from exp so it lowers cleanly
    # and stays on the VPU/EUP.
    a1, a2, a3 = 0.254829592, -0.284496736, 1.421413741
    a4, a5, p = -1.453152027, 1.061405429, 0.3275911
    ax = jnp.abs(x)
    t = 1.0 / (1.0 + p * ax)
    poly = ((((a5 * t + a4) * t + a3) * t + a2) * t + a1) * t
    y = 1.0 - poly * jnp.exp(-ax * ax)
    return jnp.where(x < 0.0, -y, y)


def _gelu_exact(x):
    return 0.5 * x * (1.0 + _erf(x * _SQRT_HALF))


# ------------------------------ kernels --------------------------------------


def ln_matmul_kernel(x_ref, g_ref, beta_ref, w_ref, bias_ref, o_ref, h_sc,
                     *, gelu):
    # y = LayerNorm(x) @ W + b   [+ exact-erf GELU epilogue]
    # K (=C) is un-tiled because LN needs the full row. LN stats are computed
    # once per M tile (j == 0) into a VMEM scratch and reused for every N tile.
    @pl.when(pl.program_id(1) == 0)
    def _():
        x = x_ref[...].astype(jnp.float32)
        mean = jnp.mean(x, axis=-1, keepdims=True)
        xc = x - mean
        var = jnp.mean(xc * xc, axis=-1, keepdims=True)
        h = xc * lax.rsqrt(var + 1e-5) * g_ref[...] + beta_ref[...]
        h_sc[...] = h.astype(h_sc.dtype)

    y = jnp.dot(h_sc[...], w_ref[...],
                preferred_element_type=jnp.float32) + bias_ref[...]
    if gelu:
        y = _gelu_exact(y)
    o_ref[...] = y.astype(o_ref.dtype)


def matmul_residual_kernel(x_ref, w_ref, bias_ref, res_ref, o_ref, acc_ref):
    # out = res + x @ W + b   (K-tiled GEMM with f32 VMEM accumulator)
    k = pl.program_id(2)

    @pl.when(k == 0)
    def _():
        acc_ref[...] = jnp.zeros_like(acc_ref)

    acc_ref[...] += jnp.dot(x_ref[...], w_ref[...],
                            preferred_element_type=jnp.float32)

    @pl.when(k == pl.num_programs(2) - 1)
    def _():
        out = acc_ref[...] + bias_ref[...] + res_ref[...].astype(jnp.float32)
        o_ref[...] = out.astype(o_ref.dtype)


def flash_attn_kernel(q_ref, k_ref, v_ref, o_ref, m_sc, l_sc, acc_sc,
                      *, tq, tk):
    # scaled_dot_product_attention(..., is_causal=True, dropout_p=0), flash
    # style, batched over a group of (batch, head) slices (leading block dim).
    # The 1/sqrt(D) scale is pre-folded into the q weights in the wrapper.
    qi = pl.program_id(1)
    ki = pl.program_id(2)

    @pl.when(ki == 0)
    def _():
        m_sc[...] = jnp.full_like(m_sc, -jnp.inf)
        l_sc[...] = jnp.zeros_like(l_sc)
        acc_sc[...] = jnp.zeros_like(acc_sc)

    def scores():
        # Contract the last dims directly so K stays in native layout (no XLU
        # transpose); batched over the leading group dim.
        return jnp.einsum('gqd,gkd->gqk', q_ref[...], k_ref[...],
                          preferred_element_type=jnp.float32)

    def update(s):
        m_prev = m_sc[...]
        m_new = jnp.maximum(m_prev, jnp.max(s, axis=-1, keepdims=True))
        alpha = jnp.exp(m_prev - m_new)
        p = jnp.exp(s - m_new)
        l_sc[...] = alpha * l_sc[...] + jnp.sum(p, axis=-1, keepdims=True)
        acc_sc[...] = alpha * acc_sc[...] + jnp.einsum(
            'gqk,gkd->gqd', p.astype(v_ref.dtype), v_ref[...],
            preferred_element_type=jnp.float32)
        m_sc[...] = m_new

    # Interior (fully-below-diagonal) kv tile: no causal mask work needed.
    @pl.when(ki < qi)
    def _():
        update(scores())

    # Diagonal tile (tq == tk => the only partial tile): mask, then finalize.
    @pl.when(ki == qi)
    def _():
        s = scores()
        qpos = qi * tq + lax.broadcasted_iota(jnp.int32, (tq, tk), 0)
        kpos = ki * tk + lax.broadcasted_iota(jnp.int32, (tq, tk), 1)
        # Large finite negative instead of -inf: NaN-safe regardless of tiling.
        s = jnp.where(kpos <= qpos, s, -1e30)
        update(s)
        inv_l = pl.reciprocal(l_sc[...], approx=True)
        o_ref[...] = (acc_sc[...] * inv_l).astype(o_ref.dtype)

    # ki > qi: fully masked. No compute, and the kv index_map clamp means no
    # fresh DMA was issued for this step either.


# --------------------------- pallas wrappers ----------------------------------


def ln_matmul(x2d, gamma, beta, wT, bias, gelu=False):
    M, K = x2d.shape
    N = wT.shape[1]
    itemsize = max(x2d.dtype.itemsize, wT.dtype.itemsize)
    tm = _pick_tile(M, (256, 128, 64, 32, 16, 8), 8)
    tn = _pick_tile(N, (512, 256, 128), 128)

    # K is un-tiled: budget the double-buffered (tm,K) x, (K,tn) W, (tm,tn) out,
    # plus the (tm,K) LN scratch, against a conservative scoped-VMEM target.
    def vmem_bytes(tm_, tn_):
        return (2 * tm_ * K + tm_ * K + 2 * K * tn_ + 2 * tm_ * tn_
                + 2 * tn_) * itemsize

    while (vmem_bytes(tm, tn) > _VMEM_BUDGET and tn > 128 and tn % 2 == 0
           and N % (tn // 2) == 0):
        tn //= 2
    while (vmem_bytes(tm, tn) > _VMEM_BUDGET and tm > 8 and tm % 2 == 0
           and M % (tm // 2) == 0):
        tm //= 2

    kern = functools.partial(ln_matmul_kernel, gelu=gelu)
    return pl.pallas_call(
        kern,
        out_shape=jax.ShapeDtypeStruct((M, N), x2d.dtype),
        grid=(M // tm, N // tn),
        in_specs=[
            pl.BlockSpec((tm, K), lambda i, j: (i, 0)),
            pl.BlockSpec((1, K), lambda i, j: (0, 0)),
            pl.BlockSpec((1, K), lambda i, j: (0, 0)),
            pl.BlockSpec((K, tn), lambda i, j: (0, j)),
            pl.BlockSpec((1, tn), lambda i, j: (0, j)),
        ],
        out_specs=pl.BlockSpec((tm, tn), lambda i, j: (i, j)),
        scratch_shapes=[pltpu.VMEM((tm, K), wT.dtype)],
        # j must stay sequential per core: the LN scratch written at j == 0 is
        # reused for all later j of the same i.
        compiler_params=pltpu.CompilerParams(
            dimension_semantics=("parallel", "arbitrary"),
            vmem_limit_bytes=_VMEM_LIMIT),
    )(x2d, gamma.reshape(1, K), beta.reshape(1, K), wT, bias.reshape(1, N))


def matmul_residual(x2d, wT, bias, res):
    M, K = x2d.shape
    N = wT.shape[1]
    itemsize = max(x2d.dtype.itemsize, wT.dtype.itemsize)
    tm = _pick_tile(M, (256, 128, 64, 32, 16, 8), 8)
    tn = _pick_tile(N, (512, 256, 128), 128)
    tk = _pick_tile(K, (1024, 512, 256, 128), 128)

    def vmem_bytes(tm_, tn_, tk_):
        return (2 * (tm_ * tk_ + tk_ * tn_ + tn_ + 2 * tm_ * tn_)) * itemsize \
            + tm_ * tn_ * 4

    while (vmem_bytes(tm, tn, tk) > _VMEM_BUDGET and tk > 128 and tk % 2 == 0
           and K % (tk // 2) == 0):
        tk //= 2
    while (vmem_bytes(tm, tn, tk) > _VMEM_BUDGET and tn > 128 and tn % 2 == 0
           and N % (tn // 2) == 0):
        tn //= 2

    return pl.pallas_call(
        matmul_residual_kernel,
        out_shape=jax.ShapeDtypeStruct((M, N), res.dtype),
        grid=(M // tm, N // tn, K // tk),
        in_specs=[
            pl.BlockSpec((tm, tk), lambda i, j, k: (i, k)),
            pl.BlockSpec((tk, tn), lambda i, j, k: (k, j)),
            pl.BlockSpec((1, tn), lambda i, j, k: (0, j)),
            pl.BlockSpec((tm, tn), lambda i, j, k: (i, j)),
        ],
        out_specs=pl.BlockSpec((tm, tn), lambda i, j, k: (i, j)),
        scratch_shapes=[pltpu.VMEM((tm, tn), jnp.float32)],
        # out = res + x@W + b overwrites the residual logically: alias it.
        input_output_aliases={3: 0},
        compiler_params=pltpu.CompilerParams(
            dimension_semantics=("parallel", "parallel", "arbitrary"),
            vmem_limit_bytes=_VMEM_LIMIT),
    )(x2d, wT, bias.reshape(1, N), res)


def flash_attention(q, k, v):
    BH, T, D = q.shape
    tq = _pick_tile(T, (256, 128, 64, 32, 16, 8), 8)
    tk = tq
    itemsize = q.dtype.itemsize

    # Group g (batch, head) slices per grid step: larger, lane-friendlier blocks
    # and fewer grid steps, subject to a VMEM budget (double-buffered q/k/v/o
    # plus f32 m/l/acc scratch).
    g = 1
    for cand in (16, 8, 4, 2):
        if BH % cand != 0:
            continue
        vmem = 2 * cand * (2 * tq + 2 * tk) * D * itemsize \
            + cand * tq * (D + 2) * 4
        if vmem <= (16 << 20):
            g = cand
            break

    kern = functools.partial(flash_attn_kernel, tq=tq, tk=tk)
    qspec = pl.BlockSpec((g, tq, D), lambda b, qi, ki: (b, qi, 0))
    # Clamp the kv block index so fully-masked (above-diagonal) steps reuse the
    # already-resident diagonal block instead of DMAing a fresh tile.
    kvspec = pl.BlockSpec((g, tk, D),
                          lambda b, qi, ki: (b, jnp.minimum(ki, qi), 0))
    return pl.pallas_call(
        kern,
        out_shape=jax.ShapeDtypeStruct((BH, T, D), q.dtype),
        grid=(BH // g, T // tq, T // tk),
        in_specs=[qspec, kvspec, kvspec],
        out_specs=qspec,
        scratch_shapes=[
            pltpu.VMEM((g, tq, 1), jnp.float32),
            pltpu.VMEM((g, tq, 1), jnp.float32),
            pltpu.VMEM((g, tq, D), jnp.float32),
        ],
        # TODO(synk): on v7x, marking the leading axis CORE_PARALLEL (or an
        # explicit 2-core mesh) would use both TensorCores; left as "parallel"
        # here since it is measured-neutral on single-TC v5e/v6e.
        compiler_params=pltpu.CompilerParams(
            dimension_semantics=("parallel", "parallel", "arbitrary"),
            vmem_limit_bytes=_VMEM_LIMIT),
    )(q, k, v)


# ----------------------------- Block forward ----------------------------------


def _merge_lora(p):
    # Fold the low-rank update into the dense weight once per forward (tiny
    # K=r..2r GEMM in plain JAX) -> kernels run a single dense MXU GEMM.
    # TODO(synk): for production, cast the merged weights (and activations) to
    # bf16 here to hit full MXU throughput; kept in the input dtype so the f32
    # test matches the reference tightly.
    return p["wT"] + p["scale"] * (p["A"] @ p["B"])


def block_forward(x, params, n_head):
    B, T, C = x.shape
    H = n_head
    D = C // H
    M = B * T
    x2 = x.reshape(M, C)

    # ---- x = x + attn(ln_1(x)) : LN fused into the qkv GEMM ------------------
    w_qkv = _merge_lora(params["attn_c_attn"])
    b_qkv = params["attn_c_attn"]["b"]
    # Fold the 1/sqrt(D) attention scale into the q columns of the merged qkv
    # weight/bias (exact; removes a per-kv-step multiply from the flash kernel).
    scale = 1.0 / math.sqrt(D)
    col_scale = jnp.concatenate(
        [jnp.full((C,), scale, w_qkv.dtype), jnp.ones((2 * C,), w_qkv.dtype)])
    w_qkv = w_qkv * col_scale[None, :]
    b_qkv = b_qkv * col_scale.astype(b_qkv.dtype)

    qkv = ln_matmul(x2, params["ln1_w"], params["ln1_b"], w_qkv, b_qkv)
    qkv = qkv.reshape(B, T, 3 * C)
    q, k, v = jnp.split(qkv, 3, axis=2)

    # TODO(synk): head split/merge transposes are left to XLA; head-indexed
    # BlockSpecs on the flat (M, 3C) array need a last block dim of D, which
    # violates the 128-lane block rule whenever D is not a multiple of 128.
    def to_heads(t):
        return t.reshape(B, T, H, D).transpose(0, 2, 1, 3).reshape(B * H, T, D)

    y = flash_attention(to_heads(q), to_heads(k), to_heads(v))
    y = y.reshape(B, H, T, D).transpose(0, 2, 1, 3).reshape(M, C)

    w_proj = _merge_lora(params["attn_c_proj"])
    x2 = matmul_residual(y, w_proj, params["attn_c_proj"]["b"], x2)

    # ---- x = x + mlp(ln_2(x)) : LN + GELU fused around the fc GEMM -----------
    w_fc = _merge_lora(params["mlp_c_fc"])
    h = ln_matmul(x2, params["ln2_w"], params["ln2_b"], w_fc,
                  params["mlp_c_fc"]["b"], gelu=True)
    w_p2 = _merge_lora(params["mlp_c_proj"])
    x2 = matmul_residual(h, w_p2, params["mlp_c_proj"]["b"], x2)

    return x2.reshape(B, T, C)


# ------------------------------ parameters ------------------------------------


def init_params(key, C, r, alpha):
    ks = iter(jax.random.split(key, 24))
    scale = alpha / r

    def lora1(cin, cout):  # LoRALinear
        W = jax.random.normal(next(ks), (cout, cin), jnp.float32) * 0.02
        b = jax.random.normal(next(ks), (cout,), jnp.float32) * 0.01
        A = jax.random.normal(next(ks), (cin, r), jnp.float32) * 0.05
        Bm = jax.random.normal(next(ks), (r, cout), jnp.float32) * 0.05
        return {"wT": W.T, "b": b, "A": A, "B": Bm, "scale": scale}

    def lora2(cin, cout):  # LoRALinear2 -> exact rank-2r representation
        W = jax.random.normal(next(ks), (cout, cin), jnp.float32) * 0.02
        b = jax.random.normal(next(ks), (cout,), jnp.float32) * 0.01
        A1 = jax.random.normal(next(ks), (cin, r), jnp.float32) * 0.05
        B1 = jax.random.normal(next(ks), (r, cout), jnp.float32) * 0.05
        A2 = jax.random.normal(next(ks), (cin, r), jnp.float32) * 0.05
        B2 = jax.random.normal(next(ks), (r, cout), jnp.float32) * 0.05
        A = jnp.concatenate([A1, A2], axis=1)
        Bm = 0.5 * jnp.concatenate([B1, B2], axis=0)
        return {"wT": W.T, "b": b, "A": A, "B": Bm, "scale": scale}

    return {
        "ln1_w": jnp.ones((C,), jnp.float32),
        "ln1_b": jnp.zeros((C,), jnp.float32),
        "ln2_w": jnp.ones((C,), jnp.float32),
        "ln2_b": jnp.zeros((C,), jnp.float32),
        "attn_c_attn": lora1(C, 3 * C),
        "attn_c_proj": lora1(C, C),
        "mlp_c_fc": lora2(C, 4 * C),
        "mlp_c_proj": lora2(4 * C, C),
    }


# ------------------------------ reference -------------------------------------


def ref_block(x, params, n_head):
    def ln(t, w, b):
        m = t.mean(-1, keepdims=True)
        v = ((t - m) ** 2).mean(-1, keepdims=True)
        return (t - m) / jnp.sqrt(v + 1e-5) * w + b

    def lora(t, p):
        return t @ p["wT"] + p["b"] + (t @ p["A"]) @ p["B"] * p["scale"]

    B, T, C = x.shape
    H = n_head
    D = C // H
    h = ln(x, params["ln1_w"], params["ln1_b"])
    qkv = lora(h, params["attn_c_attn"])
    q, k, v = jnp.split(qkv, 3, axis=-1)

    def heads(t):
        return t.reshape(B, T, H, D).transpose(0, 2, 1, 3)

    q, k, v = heads(q), heads(k), heads(v)
    s = (q @ jnp.swapaxes(k, -1, -2)) / math.sqrt(D)
    mask = jnp.tril(jnp.ones((T, T), bool))
    s = jnp.where(mask, s, -jnp.inf)
    y = jax.nn.softmax(s, axis=-1) @ v
    y = y.transpose(0, 2, 1, 3).reshape(B, T, C)
    x = x + lora(y, params["attn_c_proj"])
    h = ln(x, params["ln2_w"], params["ln2_b"])
    h = lora(h, params["mlp_c_fc"])
    h = jax.nn.gelu(h, approximate=False)
    h = lora(h, params["mlp_c_proj"])
    return x + h


# --------------------------------- main ---------------------------------------

if __name__ == "__main__":
    B, T, C, H = 2, 8, 32, 4          # batch, seq, n_embd, n_head
    lora_rank, lora_alpha = 4, 8.0    # lora_dropout = dropout = 0.0

    key = jax.random.PRNGKey(0)
    kx, kp = jax.random.split(key)
    x = jax.random.normal(kx, (B, T, C), jnp.float32)
    params = init_params(kp, C, lora_rank, lora_alpha)

    fwd = jax.jit(functools.partial(block_forward, n_head=H))
    out = fwd(x, params)
    jax.block_until_ready(out)

    ref = ref_block(x, params, n_head=H)
    assert out.shape == (B, T, C)
    assert jnp.allclose(out, ref, atol=1e-2, rtol=1e-2), \
        float(jnp.max(jnp.abs(out - ref)))

    print("KERNEL_OK")
</pallas_src>

<mosaic_0001>
module attributes {stable_mosaic.version = 11 : i64} {
  func.func @ln_matmul_kernel(%arg0: i32, %arg1: i32, %arg2: memref<16x32xf32, #tpu.memory_space<vmem>>, %arg3: memref<1x32xf32, #tpu.memory_space<vmem>>, %arg4: memref<1x32xf32, #tpu.memory_space<vmem>>, %arg5: memref<32x96xf32, #tpu.memory_space<vmem>>, %arg6: memref<1x96xf32, #tpu.memory_space<vmem>>, %arg7: memref<16x96xf32, #tpu.memory_space<vmem>>, %arg8: memref<16x32xf32, #tpu.memory_space<vmem>>) attributes {dimension_semantics = [#tpu.dimension_semantics<parallel>, #tpu.dimension_semantics<arbitrary>], iteration_bounds = array<i64: 1, 1>, scalar_prefetch = 0 : i64, scratch_operands = 1 : i64, tpu.core_type = #tpu.core_type<tc>, window_params = [{transform_indices = @transform_0, window_bounds = array<i64: 16, 32>}, {pipeline_mode = #tpu.pipeline_mode<synchronous>, transform_indices = @transform_1, window_bounds = array<i64: 1, 32>}, {pipeline_mode = #tpu.pipeline_mode<synchronous>, transform_indices = @transform_2, window_bounds = array<i64: 1, 32>}, {transform_indices = @transform_3, window_bounds = array<i64: 32, 96>}, {transform_indices = @transform_4, window_bounds = array<i64: 1, 96>}, {transform_indices = @transform_5, window_bounds = array<i64: 16, 96>}]} {
    %c0_i32 = arith.constant 0 : i32
    %0 = arith.cmpi eq, %arg1, %c0_i32 : i32
    %1 = arith.extui %0 : i1 to i32
    %c0_i32_0 = arith.constant 0 : i32
    %2 = arith.cmpi ne, %1, %c0_i32_0 : i32
    scf.if %2 {
      %c0_8 = arith.constant 0 : index
      %c0_9 = arith.constant 0 : index
      %10 = vector.load %arg2[%c0_8, %c0_9] : memref<16x32xf32, #tpu.memory_space<vmem>>, vector<16x32xf32>
      %cst_10 = arith.constant dense<0.000000e+00> : vector<16xf32>
      %11 = vector.multi_reduction <add>, %10, %cst_10 [1] : vector<16x32xf32> to vector<16xf32>
      %12 = vector.shape_cast %11 : vector<16xf32> to vector<16x1xf32>
      %cst_11 = arith.constant 3.200000e+01 : f32
      %13 = vector.broadcast %cst_11 : f32 to vector<16x1xf32>
      %14 = arith.divf %12, %13 : vector<16x1xf32>
      %15 = vector.broadcast %14 : vector<16x1xf32> to vector<16x32xf32>
      %16 = arith.subf %10, %15 : vector<16x32xf32>
      %17 = arith.mulf %16, %16 : vector<16x32xf32>
      %cst_12 = arith.constant dense<0.000000e+00> : vector<16xf32>
      %18 = vector.multi_reduction <add>, %17, %cst_12 [1] : vector<16x32xf32> to vector<16xf32>
      %19 = vector.shape_cast %18 : vector<16xf32> to vector<16x1xf32>
      %cst_13 = arith.constant 3.200000e+01 : f32
      %20 = vector.broadcast %cst_13 : f32 to vector<16x1xf32>
      %21 = arith.divf %19, %20 : vector<16x1xf32>
      %cst_14 = arith.constant 9.99999974E-6 : f32
      %22 = vector.broadcast %cst_14 : f32 to vector<16x1xf32>
      %23 = arith.addf %21, %22 : vector<16x1xf32>
      %24 = math.rsqrt %23 : vector<16x1xf32>
      %25 = vector.broadcast %24 : vector<16x1xf32> to vector<16x32xf32>
      %26 = arith.mulf %16, %25 : vector<16x32xf32>
      %c0_15 = arith.constant 0 : index
      %c0_16 = arith.constant 0 : index
      %27 = vector.load %arg3[%c0_15, %c0_16] : memref<1x32xf32, #tpu.memory_space<vmem>>, vector<1x32xf32>
      %28 = vector.broadcast %27 : vector<1x32xf32> to vector<16x32xf32>
      %29 = arith.mulf %26, %28 : vector<16x32xf32>
      %c0_17 = arith.constant 0 : index
      %c0_18 = arith.constant 0 : index
      %30 = vector.load %arg4[%c0_17, %c0_18] : memref<1x32xf32, #tpu.memory_space<vmem>>, vector<1x32xf32>
      %31 = vector.broadcast %30 : vector<1x32xf32> to vector<16x32xf32>
      %32 = arith.addf %29, %31 : vector<16x32xf32>
      %c0_19 = arith.constant 0 : index
      %c0_20 = arith.constant 0 : index
      %33 = vector.load %arg8[%c0_19, %c0_20] : memref<16x32xf32, #tpu.memory_space<vmem>>, vector<16x32xf32>
      tpu.vector_store %arg8[%c0_19, %c0_20], %32 {strides = array<i32>} : memref<16x32xf32, #tpu.memory_space<vmem>>, vector<16x32xf32>,
    } else {
    }
    %c0 = arith.constant 0 : index
    %c0_1 = arith.constant 0 : index
    %3 = vector.load %arg8[%c0, %c0_1] : memref<16x32xf32, #tpu.memory_space<vmem>>, vector<16x32xf32>
    %c0_2 = arith.constant 0 : index
    %c0_3 = arith.constant 0 : index
    %4 = vector.load %arg5[%c0_2, %c0_3] : memref<32x96xf32, #tpu.memory_space<vmem>>, vector<32x96xf32>
    %cst = arith.constant dense<0.000000e+00> : vector<16x96xf32>
    %5 = tpu.matmul %3, %4, %cst {dimension_numbers = #tpu.dot_dimension_numbers<[1], [0], [0], [1], [0, 0, 1, 1], [], []>} : vector<16x32xf32>, vector<32x96xf32>, vector<16x96xf32> -> vector<16x96xf32>
    %c0_4 = arith.constant 0 : index
    %c0_5 = arith.constant 0 : index
    %6 = vector.load %arg6[%c0_4, %c0_5] : memref<1x96xf32, #tpu.memory_space<vmem>>, vector<1x96xf32>
    %7 = vector.broadcast %6 : vector<1x96xf32> to vector<16x96xf32>
    %8 = arith.addf %5, %7 : vector<16x96xf32>
    %c0_6 = arith.constant 0 : index
    %c0_7 = arith.constant 0 : index
    %9 = vector.load %arg7[%c0_6, %c0_7] : memref<16x96xf32, #tpu.memory_space<vmem>>, vector<16x96xf32>
    tpu.vector_store %arg7[%c0_6, %c0_7], %8 {strides = array<i32>} : memref<16x96xf32, #tpu.memory_space<vmem>>, vector<16x96xf32>,
    return
  }
  func.func @transform_0(%arg0: i32, %arg1: i32) -> (i32, i32) {
    %c0_i32 = arith.constant 0 : i32
    %c0_i32_0 = arith.constant 0 : i32
    return %arg0, %c0_i32 : i32, i32
  }
  func.func @transform_1(%arg0: i32, %arg1: i32) -> (i32, i32) {
    %c0_i32 = arith.constant 0 : i32
    %c0_i32_0 = arith.constant 0 : i32
    %c0_i32_1 = arith.constant 0 : i32
    return %c0_i32, %c0_i32_0 : i32, i32
  }
  func.func @transform_2(%arg0: i32, %arg1: i32) -> (i32, i32) {
    %c0_i32 = arith.constant 0 : i32
    %c0_i32_0 = arith.constant 0 : i32
    %c0_i32_1 = arith.constant 0 : i32
    return %c0_i32, %c0_i32_0 : i32, i32
  }
  func.func @transform_3(%arg0: i32, %arg1: i32) -> (i32, i32) {
    %c0_i32 = arith.constant 0 : i32
    %c0_i32_0 = arith.constant 0 : i32
    return %c0_i32, %arg1 : i32, i32
  }
  func.func @transform_4(%arg0: i32, %arg1: i32) -> (i32, i32) {
    %c0_i32 = arith.constant 0 : i32
    %c0_i32_0 = arith.constant 0 : i32
    return %c0_i32, %arg1 : i32, i32
  }
  func.func @transform_5(%arg0: i32, %arg1: i32) -> (i32, i32) {
    %c0_i32 = arith.constant 0 : i32
    return %arg0, %arg1 : i32, i32
  }
}

module attributes {stable_mosaic.version = 11 : i64} {
  func.func @flash_attn_kernel(%arg0: i32, %arg1: i32, %arg2: i32, %arg3: memref<8x8x8xf32, #tpu.memory_space<vmem>>, %arg4: memref<8x8x8xf32, #tpu.memory_space<vmem>>, %arg5: memref<8x8x8xf32, #tpu.memory_space<vmem>>, %arg6: memref<8x8x8xf32, #tpu.memory_space<vmem>>, %arg7: memref<8x8x1xf32, #tpu.memory_space<vmem>>, %arg8: memref<8x8x1xf32, #tpu.memory_space<vmem>>, %arg9: memref<8x8x8xf32, #tpu.memory_space<vmem>>) attributes {dimension_semantics = [#tpu.dimension_semantics<parallel>, #tpu.dimension_semantics<parallel>, #tpu.dimension_semantics<arbitrary>], iteration_bounds = array<i64: 1, 1, 1>, scalar_prefetch = 0 : i64, scratch_operands = 3 : i64, tpu.core_type = #tpu.core_type<tc>, window_params = [{transform_indices = @transform_0, window_bounds = array<i64: 8, 8, 8>}, {transform_indices = @transform_1, window_bounds = array<i64: 8, 8, 8>}, {transform_indices = @transform_2, window_bounds = array<i64: 8, 8, 8>}, {transform_indices = @transform_3, window_bounds = array<i64: 8, 8, 8>}]} {
    %c0_i32 = arith.constant 0 : i32
    %0 = arith.cmpi eq, %arg2, %c0_i32 : i32
    %1 = arith.extui %0 : i1 to i32
    %c0_i32_0 = arith.constant 0 : i32
    %2 = arith.cmpi ne, %1, %c0_i32_0 : i32
    scf.if %2 {
      %cst = arith.constant 0xFF800000 : f32
      %9 = vector.broadcast %cst : f32 to vector<8x8x1xf32>
      %c0 = arith.constant 0 : index
      %c0_3 = arith.constant 0 : index
      %c0_4 = arith.constant 0 : index
      %10 = vector.load %arg7[%c0, %c0_3, %c0_4] : memref<8x8x1xf32, #tpu.memory_space<vmem>>, vector<8x8x1xf32>
      tpu.vector_store %arg7[%c0, %c0_3, %c0_4], %9 {strides = array<i32>} : memref<8x8x1xf32, #tpu.memory_space<vmem>>, vector<8x8x1xf32>,
      %cst_5 = arith.constant 0.000000e+00 : f32
      %11 = vector.broadcast %cst_5 : f32 to vector<8x8x1xf32>
      %c0_6 = arith.constant 0 : index
      %c0_7 = arith.constant 0 : index
      %c0_8 = arith.constant 0 : index
      %12 = vector.load %arg8[%c0_6, %c0_7, %c0_8] : memref<8x8x1xf32, #tpu.memory_space<vmem>>, vector<8x8x1xf32>
      tpu.vector_store %arg8[%c0_6, %c0_7, %c0_8], %11 {strides = array<i32>} : memref<8x8x1xf32, #tpu.memory_space<vmem>>, vector<8x8x1xf32>,
      %cst_9 = arith.constant 0.000000e+00 : f32
      %13 = vector.broadcast %cst_9 : f32 to vector<8x8x8xf32>
      %c0_10 = arith.constant 0 : index
      %c0_11 = arith.constant 0 : index
      %c0_12 = arith.constant 0 : index
      %14 = vector.load %arg9[%c0_10, %c0_11, %c0_12] : memref<8x8x8xf32, #tpu.memory_space<vmem>>, vector<8x8x8xf32>
      tpu.vector_store %arg9[%c0_10, %c0_11, %c0_12], %13 {strides = array<i32>} : memref<8x8x8xf32, #tpu.memory_space<vmem>>, vector<8x8x8xf32>,
    } else {
    }
    %3 = arith.cmpi slt, %arg2, %arg1 : i32
    %4 = arith.extui %3 : i1 to i32
    %c0_i32_1 = arith.constant 0 : i32
    %5 = arith.cmpi ne, %4, %c0_i32_1 : i32
    scf.if %5 {
      %c0 = arith.constant 0 : index
      %c0_3 = arith.constant 0 : index
      %c0_4 = arith.constant 0 : index
      %9 = vector.load %arg3[%c0, %c0_3, %c0_4] : memref<8x8x8xf32, #tpu.memory_space<vmem>>, vector<8x8x8xf32>
      %c0_5 = arith.constant 0 : index
      %c0_6 = arith.constant 0 : index
      %c0_7 = arith.constant 0 : index
      %10 = vector.load %arg4[%c0_5, %c0_6, %c0_7] : memref<8x8x8xf32, #tpu.memory_space<vmem>>, vector<8x8x8xf32>
      "tpu.trace_start"() <{level = 10 : i32, message = "gqd,gkd->gqk"}> : () -> ()
      %cst = arith.constant dense<0.000000e+00> : vector<8x8x8xf32>
      %11 = tpu.matmul %9, %10, %cst {dimension_numbers = #tpu.dot_dimension_numbers<[2], [2], [1], [1], [0, 0, 0, 1, 1, 1], [0], [0]>} : vector<8x8x8xf32>, vector<8x8x8xf32>, vector<8x8x8xf32> -> vector<8x8x8xf32>
      "tpu.trace_stop"() : () -> ()
      %c0_8 = arith.constant 0 : index
      %c0_9 = arith.constant 0 : index
      %c0_10 = arith.constant 0 : index
      %12 = vector.load %arg7[%c0_8, %c0_9, %c0_10] : memref<8x8x1xf32, #tpu.memory_space<vmem>>, vector<8x8x1xf32>
      %cst_11 = arith.constant dense<0xFF800000> : vector<8x8xf32>
      %13 = vector.multi_reduction <maximumf>, %11, %cst_11 [2] : vector<8x8x8xf32> to vector<8x8xf32>
      %14 = vector.shape_cast %13 : vector<8x8xf32> to vector<8x8x1xf32>
      %15 = arith.maximumf %12, %14 : vector<8x8x1xf32>
      %16 = arith.subf %12, %15 : vector<8x8x1xf32>
      %17 = math.exp %16 : vector<8x8x1xf32>
      %18 = vector.broadcast %15 : vector<8x8x1xf32> to vector<8x8x8xf32>
      %19 = arith.subf %11, %18 : vector<8x8x8xf32>
      %20 = math.exp %19 : vector<8x8x8xf32>
      %c0_12 = arith.constant 0 : index
      %c0_13 = arith.constant 0 : index
      %c0_14 = arith.constant 0 : index
      %21 = vector.load %arg8[%c0_12, %c0_13, %c0_14] : memref<8x8x1xf32, #tpu.memory_space<vmem>>, vector<8x8x1xf32>
      %22 = arith.mulf %17, %21 : vector<8x8x1xf32>
      %cst_15 = arith.constant dense<0.000000e+00> : vector<8x8xf32>
      %23 = vector.multi_reduction <add>, %20, %cst_15 [2] : vector<8x8x8xf32> to vector<8x8xf32>
      %24 = vector.shape_cast %23 : vector<8x8xf32> to vector<8x8x1xf32>
      %25 = arith.addf %22, %24 : vector<8x8x1xf32>
      %c0_16 = arith.constant 0 : index
      %c0_17 = arith.constant 0 : index
      %c0_18 = arith.constant 0 : index
      %26 = vector.load %arg8[%c0_16, %c0_17, %c0_18] : memref<8x8x1xf32, #tpu.memory_space<vmem>>, vector<8x8x1xf32>
      tpu.vector_store %arg8[%c0_16, %c0_17, %c0_18], %25 {strides = array<i32>} : memref<8x8x1xf32, #tpu.memory_space<vmem>>, vector<8x8x1xf32>,
      %c0_19 = arith.constant 0 : index
      %c0_20 = arith.constant 0 : index
      %c0_21 = arith.constant 0 : index
      %27 = vector.load %arg9[%c0_19, %c0_20, %c0_21] : memref<8x8x8xf32, #tpu.memory_space<vmem>>, vector<8x8x8xf32>
      %28 = vector.broadcast %17 : vector<8x8x1xf32> to vector<8x8x8xf32>
      %29 = arith.mulf %28, %27 : vector<8x8x8xf32>
      %c0_22 = arith.constant 0 : index
      %c0_23 = arith.constant 0 : index
      %c0_24 = arith.constant 0 : index
      %30 = vector.load %arg5[%c0_22, %c0_23, %c0_24] : memref<8x8x8xf32, #tpu.memory_space<vmem>>, vector<8x8x8xf32>
      "tpu.trace_start"() <{level = 10 : i32, message = "gqk,gkd->gqd"}> : () -> ()
      %cst_25 = arith.constant dense<0.000000e+00> : vector<8x8x8xf32>
      %31 = tpu.matmul %20, %30, %cst_25 {dimension_numbers = #tpu.dot_dimension_numbers<[2], [1], [1], [2], [0, 0, 0, 1, 1, 2], [0], [0]>} : vector<8x8x8xf32>, vector<8x8x8xf32>, vector<8x8x8xf32> -> vector<8x8x8xf32>
      "tpu.trace_stop"() : () -> ()
      %32 = arith.addf %29, %31 : vector<8x8x8xf32>
      %c0_26 = arith.constant 0 : index
      %c0_27 = arith.constant 0 : index
      %c0_28 = arith.constant 0 : index
      %33 = vector.load %arg9[%c0_26, %c0_27, %c0_28] : memref<8x8x8xf32, #tpu.memory_space<vmem>>, vector<8x8x8xf32>
      tpu.vector_store %arg9[%c0_26, %c0_27, %c0_28], %32 {strides = array<i32>} : memref<8x8x8xf32, #tpu.memory_space<vmem>>, vector<8x8x8xf32>,
      %c0_29 = arith.constant 0 : index
      %c0_30 = arith.constant 0 : index
      %c0_31 = arith.constant 0 : index
      %34 = vector.load %arg7[%c0_29, %c0_30, %c0_31] : memref<8x8x1xf32, #tpu.memory_space<vmem>>, vector<8x8x1xf32>
      tpu.vector_store %arg7[%c0_29, %c0_30, %c0_31], %15 {strides = array<i32>} : memref<8x8x1xf32, #tpu.memory_space<vmem>>, vector<8x8x1xf32>,
    } else {
    }
    %6 = arith.cmpi eq, %arg2, %arg1 : i32
    %7 = arith.extui %6 : i1 to i32
    %c0_i32_2 = arith.constant 0 : i32
    %8 = arith.cmpi ne, %7, %c0_i32_2 : i32
    scf.if %8 {
      %c0 = arith.constant 0 : index
      %c0_3 = arith.constant 0 : index
      %c0_4 = arith.constant 0 : index
      %9 = vector.load %arg3[%c0, %c0_3, %c0_4] : memref<8x8x8xf32, #tpu.memory_space<vmem>>, vector<8x8x8xf32>
      %c0_5 = arith.constant 0 : index
      %c0_6 = arith.constant 0 : index
      %c0_7 = arith.constant 0 : index
      %10 = vector.load %arg4[%c0_5, %c0_6, %c0_7] : memref<8x8x8xf32, #tpu.memory_space<vmem>>, vector<8x8x8xf32>
      "tpu.trace_start"() <{level = 10 : i32, message = "gqd,gkd->gqk"}> : () -> ()
      %cst = arith.constant dense<0.000000e+00> : vector<8x8x8xf32>
      %11 = tpu.matmul %9, %10, %cst {dimension_numbers = #tpu.dot_dimension_numbers<[2], [2], [1], [1], [0, 0, 0, 1, 1, 1], [0], [0]>} : vector<8x8x8xf32>, vector<8x8x8xf32>, vector<8x8x8xf32> -> vector<8x8x8xf32>
      "tpu.trace_stop"() : () -> ()
      %c8_i32 = arith.constant 8 : i32
      %12 = arith.muli %arg1, %c8_i32 : i32
      %13 = tpu.iota {dimensions = array<i32: 0>} : vector<8x8xi32>
      %14 = vector.broadcast %12 : i32 to vector<8x8xi32>
      %15 = arith.addi %14, %13 : vector<8x8xi32>
      %c8_i32_8 = arith.constant 8 : i32
      %16 = arith.muli %arg2, %c8_i32_8 : i32
      %17 = tpu.iota {dimensions = array<i32: 1>} : vector<8x8xi32>
      %18 = vector.broadcast %16 : i32 to vector<8x8xi32>
      %19 = arith.addi %18, %17 : vector<8x8xi32>
      %20 = arith.cmpi sle, %19, %15 : vector<8x8xi32>
      %cst_9 = arith.constant -1.000000e+30 : f32
      %21 = vector.shape_cast %20 : vector<8x8xi1> to vector<1x8x8xi1>
      %22 = vector.broadcast %21 : vector<1x8x8xi1> to vector<8x8x8xi1>
      %23 = vector.broadcast %cst_9 : f32 to vector<8x8x8xf32>
      %24 = arith.select %22, %11, %23 : vector<8x8x8xi1>, vector<8x8x8xf32>
      %c0_10 = arith.constant 0 : index
      %c0_11 = arith.constant 0 : index
      %c0_12 = arith.constant 0 : index
      %25 = vector.load %arg7[%c0_10, %c0_11, %c0_12] : memref<8x8x1xf32, #tpu.memory_space<vmem>>, vector<8x8x1xf32>
      %cst_13 = arith.constant dense<0xFF800000> : vector<8x8xf32>
      %26 = vector.multi_reduction <maximumf>, %24, %cst_13 [2] : vector<8x8x8xf32> to vector<8x8xf32>
      %27 = vector.shape_cast %26 : vector<8x8xf32> to vector<8x8x1xf32>
      %28 = arith.maximumf %25, %27 : vector<8x8x1xf32>
      %29 = arith.subf %25, %28 : vector<8x8x1xf32>
      %30 = math.exp %29 : vector<8x8x1xf32>
      %31 = vector.broadcast %28 : vector<8x8x1xf32> to vector<8x8x8xf32>
      %32 = arith.subf %24, %31 : vector<8x8x8xf32>
      %33 = math.exp %32 : vector<8x8x8xf32>
      %c0_14 = arith.constant 0 : index
      %c0_15 = arith.constant 0 : index
      %c0_16 = arith.constant 0 : index
      %34 = vector.load %arg8[%c0_14, %c0_15, %c0_16] : memref<8x8x1xf32, #tpu.memory_space<vmem>>, vector<8x8x1xf32>
      %35 = arith.mulf %30, %34 : vector<8x8x1xf32>
      %cst_17 = arith.constant dense<0.000000e+00> : vector<8x8xf32>
      %36 = vector.multi_reduction <add>, %33, %cst_17 [2] : vector<8x8x8xf32> to vector<8x8xf32>
      %37 = vector.shape_cast %36 : vector<8x8xf32> to vector<8x8x1xf32>
      %38 = arith.addf %35, %37 : vector<8x8x1xf32>
      %c0_18 = arith.constant 0 : index
      %c0_19 = arith.constant 0 : index
      %c0_20 = arith.constant 0 : index
      %39 = vector.load %arg8[%c0_18, %c0_19, %c0_20] : memref<8x8x1xf32, #tpu.memory_space<vmem>>, vector<8x8x1xf32>
      tpu.vector_store %arg8[%c0_18, %c0_19, %c0_20], %38 {strides = array<i32>} : memref<8x8x1xf32, #tpu.memory_space<vmem>>, vector<8x8x1xf32>,
      %c0_21 = arith.constant 0 : index
      %c0_22 = arith.constant 0 : index
      %c0_23 = arith.constant 0 : index
      %40 = vector.load %arg9[%c0_21, %c0_22, %c0_23] : memref<8x8x8xf32, #tpu.memory_space<vmem>>, vector<8x8x8xf32>
      %41 = vector.broadcast %30 : vector<8x8x1xf32> to vector<8x8x8xf32>
      %42 = arith.mulf %41, %40 : vector<8x8x8xf32>
      %c0_24 = arith.constant 0 : index
      %c0_25 = arith.constant 0 : index
      %c0_26 = arith.constant 0 : index
      %43 = vector.load %arg5[%c0_24, %c0_25, %c0_26] : memref<8x8x8xf32, #tpu.memory_space<vmem>>, vector<8x8x8xf32>
      "tpu.trace_start"() <{level = 10 : i32, message = "gqk,gkd->gqd"}> : () -> ()
      %cst_27 = arith.constant dense<0.000000e+00> : vector<8x8x8xf32>
      %44 = tpu.matmul %33, %43, %cst_27 {dimension_numbers = #tpu.dot_dimension_numbers<[2], [1], [1], [2], [0, 0, 0, 1, 1, 2], [0], [0]>} : vector<8x8x8xf32>, vector<8x8x8xf32>, vector<8x8x8xf32> -> vector<8x8x8xf32>
      "tpu.trace_stop"() : () -> ()
      %45 = arith.addf %42, %44 : vector<8x8x8xf32>
      %c0_28 = arith.constant 0 : index
      %c0_29 = arith.constant 0 : index
      %c0_30 = arith.constant 0 : index
      %46 = vector.load %arg9[%c0_28, %c0_29, %c0_30] : memref<8x8x8xf32, #tpu.memory_space<vmem>>, vector<8x8x8xf32>
      tpu.vector_store %arg9[%c0_28, %c0_29, %c0_30], %45 {strides = array<i32>} : memref<8x8x8xf32, #tpu.memory_space<vmem>>, vector<8x8x8xf32>,
      %c0_31 = arith.constant 0 : index
      %c0_32 = arith.constant 0 : index
      %c0_33 = arith.constant 0 : index
      %47 = vector.load %arg7[%c0_31, %c0_32, %c0_33] : memref<8x8x1xf32, #tpu.memory_space<vmem>>, vector<8x8x1xf32>
      tpu.vector_store %arg7[%c0_31, %c0_32, %c0_33], %28 {strides = array<i32>} : memref<8x8x1xf32, #tpu.memory_space<vmem>>, vector<8x8x1xf32>,
      %c0_34 = arith.constant 0 : index
      %c0_35 = arith.constant 0 : index
      %c0_36 = arith.constant 0 : index
      %48 = vector.load %arg8[%c0_34, %c0_35, %c0_36] : memref<8x8x1xf32, #tpu.memory_space<vmem>>, vector<8x8x1xf32>
      %49 = tpu.reciprocal %48 {approx = true} : vector<8x8x1xf32> -> vector<8x8x1xf32>
      %c0_37 = arith.constant 0 : index
      %c0_38 = arith.constant 0 : index
      %c0_39 = arith.constant 0 : index
      %50 = vector.load %arg9[%c0_37, %c0_38, %c0_39] : memref<8x8x8xf32, #tpu.memory_space<vmem>>, vector<8x8x8xf32>
      %51 = vector.broadcast %49 : vector<8x8x1xf32> to vector<8x8x8xf32>
      %52 = arith.mulf %50, %51 : vector<8x8x8xf32>
      %c0_40 = arith.constant 0 : index
      %c0_41 = arith.constant 0 : index
      %c0_42 = arith.constant 0 : index
      %53 = vector.load %arg6[%c0_40, %c0_41, %c0_42] : memref<8x8x8xf32, #tpu.memory_space<vmem>>, vector<8x8x8xf32>
      tpu.vector_store %arg6[%c0_40, %c0_41, %c0_42], %52 {strides = array<i32>} : memref<8x8x8xf32, #tpu.memory_space<vmem>>, vector<8x8x8xf32>,
    } else {
    }
    return
  }
  func.func @transform_0(%arg0: i32, %arg1: i32, %arg2: i32) -> (i32, i32, i32) {
    %c0_i32 = arith.constant 0 : i32
    %c0_i32_0 = arith.constant 0 : i32
    return %arg0, %arg1, %c0_i32 : i32, i32, i32
  }
  func.func @transform_1(%arg0: i32, %arg1: i32, %arg2: i32) -> (i32, i32, i32) {
    %0 = arith.minsi %arg2, %arg1 : i32
    %c0_i32 = arith.constant 0 : i32
    %c0_i32_0 = arith.constant 0 : i32
    return %arg0, %0, %c0_i32 : i32, i32, i32
  }
  func.func @transform_2(%arg0: i32, %arg1: i32, %arg2: i32) -> (i32, i32, i32) {
    %0 = arith.minsi %arg2, %arg1 : i32
    %c0_i32 = arith.constant 0 : i32
    %c0_i32_0 = arith.constant 0 : i32
    return %arg0, %0, %c0_i32 : i32, i32, i32
  }
  func.func @transform_3(%arg0: i32, %arg1: i32, %arg2: i32) -> (i32, i32, i32) {
    %c0_i32 = arith.constant 0 : i32
    %c0_i32_0 = arith.constant 0 : i32
    return %arg0, %arg1, %c0_i32 : i32, i32, i32
  }
}

module attributes {stable_mosaic.version = 11 : i64} {
  func.func @matmul_residual_kernel(%arg0: i32, %arg1: i32, %arg2: i32, %arg3: memref<16x32xf32, #tpu.memory_space<vmem>>, %arg4: memref<32x32xf32, #tpu.memory_space<vmem>>, %arg5: memref<1x32xf32, #tpu.memory_space<vmem>>, %arg6: memref<16x32xf32, #tpu.memory_space<vmem>>, %arg7: memref<16x32xf32, #tpu.memory_space<vmem>>, %arg8: memref<16x32xf32, #tpu.memory_space<vmem>>) attributes {dimension_semantics = [#tpu.dimension_semantics<parallel>, #tpu.dimension_semantics<parallel>, #tpu.dimension_semantics<arbitrary>], iteration_bounds = array<i64: 1, 1, 1>, scalar_prefetch = 0 : i64, scratch_operands = 1 : i64, tpu.core_type = #tpu.core_type<tc>, window_params = [{transform_indices = @transform_0, window_bounds = array<i64: 16, 32>}, {transform_indices = @transform_1, window_bounds = array<i64: 32, 32>}, {transform_indices = @transform_2, window_bounds = array<i64: 1, 32>}, {transform_indices = @transform_3, window_bounds = array<i64: 16, 32>}, {transform_indices = @transform_4, window_bounds = array<i64: 16, 32>}]} {
    %c0_i32 = arith.constant 0 : i32
    %0 = arith.cmpi eq, %arg2, %c0_i32 : i32
    %1 = arith.extui %0 : i1 to i32
    %c0_i32_0 = arith.constant 0 : i32
    %2 = arith.cmpi ne, %1, %c0_i32_0 : i32
    scf.if %2 {
      %cst_10 = arith.constant 0.000000e+00 : f32
      %12 = vector.broadcast %cst_10 : f32 to vector<16x32xf32>
      %c0_11 = arith.constant 0 : index
      %c0_12 = arith.constant 0 : index
      %13 = vector.load %arg8[%c0_11, %c0_12] : memref<16x32xf32, #tpu.memory_space<vmem>>, vector<16x32xf32>
      tpu.vector_store %arg8[%c0_11, %c0_12], %12 {strides = array<i32>} : memref<16x32xf32, #tpu.memory_space<vmem>>, vector<16x32xf32>,
    } else {
    }
    %c0 = arith.constant 0 : index
    %c0_1 = arith.constant 0 : index
    %3 = vector.load %arg8[%c0, %c0_1] : memref<16x32xf32, #tpu.memory_space<vmem>>, vector<16x32xf32>
    %c0_2 = arith.constant 0 : index
    %c0_3 = arith.constant 0 : index
    %4 = vector.load %arg3[%c0_2, %c0_3] : memref<16x32xf32, #tpu.memory_space<vmem>>, vector<16x32xf32>
    %c0_4 = arith.constant 0 : index
    %c0_5 = arith.constant 0 : index
    %5 = vector.load %arg4[%c0_4, %c0_5] : memref<32x32xf32, #tpu.memory_space<vmem>>, vector<32x32xf32>
    %cst = arith.constant dense<0.000000e+00> : vector<16x32xf32>
    %6 = tpu.matmul %4, %5, %cst {dimension_numbers = #tpu.dot_dimension_numbers<[1], [0], [0], [1], [0, 0, 1, 1], [], []>} : vector<16x32xf32>, vector<32x32xf32>, vector<16x32xf32> -> vector<16x32xf32>
    %7 = arith.addf %3, %6 : vector<16x32xf32>
    %c0_6 = arith.constant 0 : index
    %c0_7 = arith.constant 0 : index
    %8 = vector.load %arg8[%c0_6, %c0_7] : memref<16x32xf32, #tpu.memory_space<vmem>>, vector<16x32xf32>
    tpu.vector_store %arg8[%c0_6, %c0_7], %7 {strides = array<i32>} : memref<16x32xf32, #tpu.memory_space<vmem>>, vector<16x32xf32>,
    %c0_i32_8 = arith.constant 0 : i32
    %9 = arith.cmpi eq, %arg2, %c0_i32_8 : i32
    %10 = arith.extui %9 : i1 to i32
    %c0_i32_9 = arith.constant 0 : i32
    %11 = arith.cmpi ne, %10, %c0_i32_9 : i32
    scf.if %11 {
      %c0_10 = arith.constant 0 : index
      %c0_11 = arith.constant 0 : index
      %12 = vector.load %arg8[%c0_10, %c0_11] : memref<16x32xf32, #tpu.memory_space<vmem>>, vector<16x32xf32>
      %c0_12 = arith.constant 0 : index
      %c0_13 = arith.constant 0 : index
      %13 = vector.load %arg5[%c0_12, %c0_13] : memref<1x32xf32, #tpu.memory_space<vmem>>, vector<1x32xf32>
      %14 = vector.broadcast %13 : vector<1x32xf32> to vector<16x32xf32>
      %15 = arith.addf %12, %14 : vector<16x32xf32>
      %c0_14 = arith.constant 0 : index
      %c0_15 = arith.constant 0 : index
      %16 = vector.load %arg6[%c0_14, %c0_15] : memref<16x32xf32, #tpu.memory_space<vmem>>, vector<16x32xf32>
      %17 = arith.addf %15, %16 : vector<16x32xf32>
      %c0_16 = arith.constant 0 : index
      %c0_17 = arith.constant 0 : index
      %18 = vector.load %arg7[%c0_16, %c0_17] : memref<16x32xf32, #tpu.memory_space<vmem>>, vector<16x32xf32>
      tpu.vector_store %arg7[%c0_16, %c0_17], %17 {strides = array<i32>} : memref<16x32xf32, #tpu.memory_space<vmem>>, vector<16x32xf32>,
    } else {
    }
    return
  }
  func.func @transform_0(%arg0: i32, %arg1: i32, %arg2: i32) -> (i32, i32) {
    %c0_i32 = arith.constant 0 : i32
    return %arg0, %arg2 : i32, i32
  }
  func.func @transform_1(%arg0: i32, %arg1: i32, %arg2: i32) -> (i32, i32) {
    %c0_i32 = arith.constant 0 : i32
    return %arg2, %arg1 : i32, i32
  }
  func.func @transform_2(%arg0: i32, %arg1: i32, %arg2: i32) -> (i32, i32) {
    %c0_i32 = arith.constant 0 : i32
    %c0_i32_0 = arith.constant 0 : i32
    return %c0_i32, %arg1 : i32, i32
  }
  func.func @transform_3(%arg0: i32, %arg1: i32, %arg2: i32) -> (i32, i32) {
    %c0_i32 = arith.constant 0 : i32
    return %arg0, %arg1 : i32, i32
  }
  func.func @transform_4(%arg0: i32, %arg1: i32, %arg2: i32) -> (i32, i32) {
    %c0_i32 = arith.constant 0 : i32
    return %arg0, %arg1 : i32, i32
  }
}

module attributes {stable_mosaic.version = 11 : i64} {
  func.func @ln_matmul_kernel(%arg0: i32, %arg1: i32, %arg2: memref<16x32xf32, #tpu.memory_space<vmem>>, %arg3: memref<1x32xf32, #tpu.memory_space<vmem>>, %arg4: memref<1x32xf32, #tpu.memory_space<vmem>>, %arg5: memref<32x128xf32, #tpu.memory_space<vmem>>, %arg6: memref<1x128xf32, #tpu.memory_space<vmem>>, %arg7: memref<16x128xf32, #tpu.memory_space<vmem>>, %arg8: memref<16x32xf32, #tpu.memory_space<vmem>>) attributes {dimension_semantics = [#tpu.dimension_semantics<parallel>, #tpu.dimension_semantics<arbitrary>], iteration_bounds = array<i64: 1, 1>, scalar_prefetch = 0 : i64, scratch_operands = 1 : i64, tpu.core_type = #tpu.core_type<tc>, window_params = [{transform_indices = @transform_0, window_bounds = array<i64: 16, 32>}, {pipeline_mode = #tpu.pipeline_mode<synchronous>, transform_indices = @transform_1, window_bounds = array<i64: 1, 32>}, {pipeline_mode = #tpu.pipeline_mode<synchronous>, transform_indices = @transform_2, window_bounds = array<i64: 1, 32>}, {transform_indices = @transform_3, window_bounds = array<i64: 32, 128>}, {transform_indices = @transform_4, window_bounds = array<i64: 1, 128>}, {transform_indices = @transform_5, window_bounds = array<i64: 16, 128>}]} {
    %c0_i32 = arith.constant 0 : i32
    %0 = arith.cmpi eq, %arg1, %c0_i32 : i32
    %1 = arith.extui %0 : i1 to i32
    %c0_i32_0 = arith.constant 0 : i32
    %2 = arith.cmpi ne, %1, %c0_i32_0 : i32
    scf.if %2 {
      %c0_23 = arith.constant 0 : index
      %c0_24 = arith.constant 0 : index
      %50 = vector.load %arg2[%c0_23, %c0_24] : memref<16x32xf32, #tpu.memory_space<vmem>>, vector<16x32xf32>
      %cst_25 = arith.constant dense<0.000000e+00> : vector<16xf32>
      %51 = vector.multi_reduction <add>, %50, %cst_25 [1] : vector<16x32xf32> to vector<16xf32>
      %52 = vector.shape_cast %51 : vector<16xf32> to vector<16x1xf32>
      %cst_26 = arith.constant 3.200000e+01 : f32
      %53 = vector.broadcast %cst_26 : f32 to vector<16x1xf32>
      %54 = arith.divf %52, %53 : vector<16x1xf32>
      %55 = vector.broadcast %54 : vector<16x1xf32> to vector<16x32xf32>
      %56 = arith.subf %50, %55 : vector<16x32xf32>
      %57 = arith.mulf %56, %56 : vector<16x32xf32>
      %cst_27 = arith.constant dense<0.000000e+00> : vector<16xf32>
      %58 = vector.multi_reduction <add>, %57, %cst_27 [1] : vector<16x32xf32> to vector<16xf32>
      %59 = vector.shape_cast %58 : vector<16xf32> to vector<16x1xf32>
      %cst_28 = arith.constant 3.200000e+01 : f32
      %60 = vector.broadcast %cst_28 : f32 to vector<16x1xf32>
      %61 = arith.divf %59, %60 : vector<16x1xf32>
      %cst_29 = arith.constant 9.99999974E-6 : f32
      %62 = vector.broadcast %cst_29 : f32 to vector<16x1xf32>
      %63 = arith.addf %61, %62 : vector<16x1xf32>
      %64 = math.rsqrt %63 : vector<16x1xf32>
      %65 = vector.broadcast %64 : vector<16x1xf32> to vector<16x32xf32>
      %66 = arith.mulf %56, %65 : vector<16x32xf32>
      %c0_30 = arith.constant 0 : index
      %c0_31 = arith.constant 0 : index
      %67 = vector.load %arg3[%c0_30, %c0_31] : memref<1x32xf32, #tpu.memory_space<vmem>>, vector<1x32xf32>
      %68 = vector.broadcast %67 : vector<1x32xf32> to vector<16x32xf32>
      %69 = arith.mulf %66, %68 : vector<16x32xf32>
      %c0_32 = arith.constant 0 : index
      %c0_33 = arith.constant 0 : index
      %70 = vector.load %arg4[%c0_32, %c0_33] : memref<1x32xf32, #tpu.memory_space<vmem>>, vector<1x32xf32>
      %71 = vector.broadcast %70 : vector<1x32xf32> to vector<16x32xf32>
      %72 = arith.addf %69, %71 : vector<16x32xf32>
      %c0_34 = arith.constant 0 : index
      %c0_35 = arith.constant 0 : index
      %73 = vector.load %arg8[%c0_34, %c0_35] : memref<16x32xf32, #tpu.memory_space<vmem>>, vector<16x32xf32>
      tpu.vector_store %arg8[%c0_34, %c0_35], %72 {strides = array<i32>} : memref<16x32xf32, #tpu.memory_space<vmem>>, vector<16x32xf32>,
    } else {
    }
    %c0 = arith.constant 0 : index
    %c0_1 = arith.constant 0 : index
    %3 = vector.load %arg8[%c0, %c0_1] : memref<16x32xf32, #tpu.memory_space<vmem>>, vector<16x32xf32>
    %c0_2 = arith.constant 0 : index
    %c0_3 = arith.constant 0 : index
    %4 = vector.load %arg5[%c0_2, %c0_3] : memref<32x128xf32, #tpu.memory_space<vmem>>, vector<32x128xf32>
    %cst = arith.constant dense<0.000000e+00> : vector<16x128xf32>
    %5 = tpu.matmul %3, %4, %cst {dimension_numbers = #tpu.dot_dimension_numbers<[1], [0], [0], [1], [0, 0, 1, 1], [], []>} : vector<16x32xf32>, vector<32x128xf32>, vector<16x128xf32> -> vector<16x128xf32>
    %c0_4 = arith.constant 0 : index
    %c0_5 = arith.constant 0 : index
    %6 = vector.load %arg6[%c0_4, %c0_5] : memref<1x128xf32, #tpu.memory_space<vmem>>, vector<1x128xf32>
    %7 = vector.broadcast %6 : vector<1x128xf32> to vector<16x128xf32>
    %8 = arith.addf %5, %7 : vector<16x128xf32>
    %cst_6 = arith.constant 5.000000e-01 : f32
    %9 = vector.broadcast %cst_6 : f32 to vector<16x128xf32>
    %10 = arith.mulf %9, %8 : vector<16x128xf32>
    %cst_7 = arith.constant 0.707106769 : f32
    %11 = vector.broadcast %cst_7 : f32 to vector<16x128xf32>
    %12 = arith.mulf %8, %11 : vector<16x128xf32>
    %13 = math.absf %12 : vector<16x128xf32>
    %cst_8 = arith.constant 0.327591091 : f32
    %14 = vector.broadcast %cst_8 : f32 to vector<16x128xf32>
    %15 = arith.mulf %14, %13 : vector<16x128xf32>
    %cst_9 = arith.constant 1.000000e+00 : f32
    %16 = vector.broadcast %cst_9 : f32 to vector<16x128xf32>
    %17 = arith.addf %16, %15 : vector<16x128xf32>
    %cst_10 = arith.constant 1.000000e+00 : f32
    %18 = vector.broadcast %cst_10 : f32 to vector<16x128xf32>
    %19 = arith.divf %18, %17 : vector<16x128xf32>
    %cst_11 = arith.constant 1.06140542 : f32
    %20 = vector.broadcast %cst_11 : f32 to vector<16x128xf32>
    %21 = arith.mulf %20, %19 : vector<16x128xf32>
    %cst_12 = arith.constant -1.45315206 : f32
    %22 = vector.broadcast %cst_12 : f32 to vector<16x128xf32>
    %23 = arith.addf %21, %22 : vector<16x128xf32>
    %24 = arith.mulf %23, %19 : vector<16x128xf32>
    %cst_13 = arith.constant 1.42141378 : f32
    %25 = vector.broadcast %cst_13 : f32 to vector<16x128xf32>
    %26 = arith.addf %24, %25 : vector<16x128xf32>
    %27 = arith.mulf %26, %19 : vector<16x128xf32>
    %cst_14 = arith.constant -0.284496725 : f32
    %28 = vector.broadcast %cst_14 : f32 to vector<16x128xf32>
    %29 = arith.addf %27, %28 : vector<16x128xf32>
    %30 = arith.mulf %29, %19 : vector<16x128xf32>
    %cst_15 = arith.constant 0.254829586 : f32
    %31 = vector.broadcast %cst_15 : f32 to vector<16x128xf32>
    %32 = arith.addf %30, %31 : vector<16x128xf32>
    %33 = arith.mulf %32, %19 : vector<16x128xf32>
    %cst_16 = arith.constant 0.000000e+00 : f32
    %34 = vector.broadcast %cst_16 : f32 to vector<16x128xf32>
    %35 = arith.subf %34, %13 : vector<16x128xf32>
    %36 = arith.mulf %35, %13 : vector<16x128xf32>
    %37 = math.exp %36 : vector<16x128xf32>
    %38 = arith.mulf %33, %37 : vector<16x128xf32>
    %cst_17 = arith.constant 1.000000e+00 : f32
    %39 = vector.broadcast %cst_17 : f32 to vector<16x128xf32>
    %40 = arith.subf %39, %38 : vector<16x128xf32>
    %cst_18 = arith.constant 0.000000e+00 : f32
    %41 = vector.broadcast %cst_18 : f32 to vector<16x128xf32>
    %42 = arith.cmpf olt, %12, %41 : vector<16x128xf32>
    %cst_19 = arith.constant 0.000000e+00 : f32
    %43 = vector.broadcast %cst_19 : f32 to vector<16x128xf32>
    %44 = arith.subf %43, %40 : vector<16x128xf32>
    %45 = arith.select %42, %44, %40 : vector<16x128xi1>, vector<16x128xf32>
    %cst_20 = arith.constant 1.000000e+00 : f32
    %46 = vector.broadcast %cst_20 : f32 to vector<16x128xf32>
    %47 = arith.addf %46, %45 : vector<16x128xf32>
    %48 = arith.mulf %10, %47 : vector<16x128xf32>
    %c0_21 = arith.constant 0 : index
    %c0_22 = arith.constant 0 : index
    %49 = vector.load %arg7[%c0_21, %c0_22] : memref<16x128xf32, #tpu.memory_space<vmem>>, vector<16x128xf32>
    tpu.vector_store %arg7[%c0_21, %c0_22], %48 {strides = array<i32>} : memref<16x128xf32, #tpu.memory_space<vmem>>, vector<16x128xf32>,
    return
  }
  func.func @transform_0(%arg0: i32, %arg1: i32) -> (i32, i32) {
    %c0_i32 = arith.constant 0 : i32
    %c0_i32_0 = arith.constant 0 : i32
    return %arg0, %c0_i32 : i32, i32
  }
  func.func @transform_1(%arg0: i32, %arg1: i32) -> (i32, i32) {
    %c0_i32 = arith.constant 0 : i32
    %c0_i32_0 = arith.constant 0 : i32
    %c0_i32_1 = arith.constant 0 : i32
    return %c0_i32, %c0_i32_0 : i32, i32
  }
  func.func @transform_2(%arg0: i32, %arg1: i32) -> (i32, i32) {
    %c0_i32 = arith.constant 0 : i32
    %c0_i32_0 = arith.constant 0 : i32
    %c0_i32_1 = arith.constant 0 : i32
    return %c0_i32, %c0_i32_0 : i32, i32
  }
  func.func @transform_3(%arg0: i32, %arg1: i32) -> (i32, i32) {
    %c0_i32 = arith.constant 0 : i32
    %c0_i32_0 = arith.constant 0 : i32
    return %c0_i32, %arg1 : i32, i32
  }
  func.func @transform_4(%arg0: i32, %arg1: i32) -> (i32, i32) {
    %c0_i32 = arith.constant 0 : i32
    %c0_i32_0 = arith.constant 0 : i32
    return %c0_i32, %arg1 : i32, i32
  }
  func.func @transform_5(%arg0: i32, %arg1: i32) -> (i32, i32) {
    %c0_i32 = arith.constant 0 : i32
    return %arg0, %arg1 : i32, i32
  }
}

module attributes {stable_mosaic.version = 11 : i64} {
  func.func @matmul_residual_kernel(%arg0: i32, %arg1: i32, %arg2: i32, %arg3: memref<16x128xf32, #tpu.memory_space<vmem>>, %arg4: memref<128x32xf32, #tpu.memory_space<vmem>>, %arg5: memref<1x32xf32, #tpu.memory_space<vmem>>, %arg6: memref<16x32xf32, #tpu.memory_space<vmem>>, %arg7: memref<16x32xf32, #tpu.memory_space<vmem>>, %arg8: memref<16x32xf32, #tpu.memory_space<vmem>>) attributes {dimension_semantics = [#tpu.dimension_semantics<parallel>, #tpu.dimension_semantics<parallel>, #tpu.dimension_semantics<arbitrary>], iteration_bounds = array<i64: 1, 1, 1>, scalar_prefetch = 0 : i64, scratch_operands = 1 : i64, tpu.core_type = #tpu.core_type<tc>, window_params = [{transform_indices = @transform_0, window_bounds = array<i64: 16, 128>}, {transform_indices = @transform_1, window_bounds = array<i64: 128, 32>}, {transform_indices = @transform_2, window_bounds = array<i64: 1, 32>}, {transform_indices = @transform_3, window_bounds = array<i64: 16, 32>}, {transform_indices = @transform_4, window_bounds = array<i64: 16, 32>}]} {
    %c0_i32 = arith.constant 0 : i32
    %0 = arith.cmpi eq, %arg2, %c0_i32 : i32
    %1 = arith.extui %0 : i1 to i32
    %c0_i32_0 = arith.constant 0 : i32
    %2 = arith.cmpi ne, %1, %c0_i32_0 : i32
    scf.if %2 {
      %cst_10 = arith.constant 0.000000e+00 : f32
      %12 = vector.broadcast %cst_10 : f32 to vector<16x32xf32>
      %c0_11 = arith.constant 0 : index
      %c0_12 = arith.constant 0 : index
      %13 = vector.load %arg8[%c0_11, %c0_12] : memref<16x32xf32, #tpu.memory_space<vmem>>, vector<16x32xf32>
      tpu.vector_store %arg8[%c0_11, %c0_12], %12 {strides = array<i32>} : memref<16x32xf32, #tpu.memory_space<vmem>>, vector<16x32xf32>,
    } else {
    }
    %c0 = arith.constant 0 : index
    %c0_1 = arith.constant 0 : index
    %3 = vector.load %arg8[%c0, %c0_1] : memref<16x32xf32, #tpu.memory_space<vmem>>, vector<16x32xf32>
    %c0_2 = arith.constant 0 : index
    %c0_3 = arith.constant 0 : index
    %4 = vector.load %arg3[%c0_2, %c0_3] : memref<16x128xf32, #tpu.memory_space<vmem>>, vector<16x128xf32>
    %c0_4 = arith.constant 0 : index
    %c0_5 = arith.constant 0 : index
    %5 = vector.load %arg4[%c0_4, %c0_5] : memref<128x32xf32, #tpu.memory_space<vmem>>, vector<128x32xf32>
    %cst = arith.constant dense<0.000000e+00> : vector<16x32xf32>
    %6 = tpu.matmul %4, %5, %cst {dimension_numbers = #tpu.dot_dimension_numbers<[1], [0], [0], [1], [0, 0, 1, 1], [], []>} : vector<16x128xf32>, vector<128x32xf32>, vector<16x32xf32> -> vector<16x32xf32>
    %7 = arith.addf %3, %6 : vector<16x32xf32>
    %c0_6 = arith.constant 0 : index
    %c0_7 = arith.constant 0 : index
    %8 = vector.load %arg8[%c0_6, %c0_7] : memref<16x32xf32, #tpu.memory_space<vmem>>, vector<16x32xf32>
    tpu.vector_store %arg8[%c0_6, %c0_7], %7 {strides = array<i32>} : memref<16x32xf32, #tpu.memory_space<vmem>>, vector<16x32xf32>,
    %c0_i32_8 = arith.constant 0 : i32
    %9 = arith.cmpi eq, %arg2, %c0_i32_8 : i32
    %10 = arith.extui %9 : i1 to i32
    %c0_i32_9 = arith.constant 0 : i32
    %11 = arith.cmpi ne, %10, %c0_i32_9 : i32
    scf.if %11 {
      %c0_10 = arith.constant 0 : index
      %c0_11 = arith.constant 0 : index
      %12 = vector.load %arg8[%c0_10, %c0_11] : memref<16x32xf32, #tpu.memory_space<vmem>>, vector<16x32xf32>
      %c0_12 = arith.constant 0 : index
      %c0_13 = arith.constant 0 : index
      %13 = vector.load %arg5[%c0_12, %c0_13] : memref<1x32xf32, #tpu.memory_space<vmem>>, vector<1x32xf32>
      %14 = vector.broadcast %13 : vector<1x32xf32> to vector<16x32xf32>
      %15 = arith.addf %12, %14 : vector<16x32xf32>
      %c0_14 = arith.constant 0 : index
      %c0_15 = arith.constant 0 : index
      %16 = vector.load %arg6[%c0_14, %c0_15] : memref<16x32xf32, #tpu.memory_space<vmem>>, vector<16x32xf32>
      %17 = arith.addf %15, %16 : vector<16x32xf32>
      %c0_16 = arith.constant 0 : index
      %c0_17 = arith.constant 0 : index
      %18 = vector.load %arg7[%c0_16, %c0_17] : memref<16x32xf32, #tpu.memory_space<vmem>>, vector<16x32xf32>
      tpu.vector_store %arg7[%c0_16, %c0_17], %17 {strides = array<i32>} : memref<16x32xf32, #tpu.memory_space<vmem>>, vector<16x32xf32>,
    } else {
    }
    return
  }
  func.func @transform_0(%arg0: i32, %arg1: i32, %arg2: i32) -> (i32, i32) {
    %c0_i32 = arith.constant 0 : i32
    return %arg0, %arg2 : i32, i32
  }
  func.func @transform_1(%arg0: i32, %arg1: i32, %arg2: i32) -> (i32, i32) {
    %c0_i32 = arith.constant 0 : i32
    return %arg2, %arg1 : i32, i32
  }
  func.func @transform_2(%arg0: i32, %arg1: i32, %arg2: i32) -> (i32, i32) {
    %c0_i32 = arith.constant 0 : i32
    %c0_i32_0 = arith.constant 0 : i32
    return %c0_i32, %arg1 : i32, i32
  }
  func.func @transform_3(%arg0: i32, %arg1: i32, %arg2: i32) -> (i32, i32) {
    %c0_i32 = arith.constant 0 : i32
    return %arg0, %arg1 : i32, i32
  }
  func.func @transform_4(%arg0: i32, %arg1: i32, %arg2: i32) -> (i32, i32) {
    %c0_i32 = arith.constant 0 : i32
    return %arg0, %arg1 : i32, i32
  }
}

</mosaic_0001>

<llo_original>
// kernel: block_forward.5
$region0: #{block_forward.5}
  #allocation0 [shape = 'u32[]', space=smem, size = 0x4, offset = 0x4, fixed_abs, tag = 'smem constant byte address 0x4 - core index']
  #allocation1 [shape = 'u32[72,128]{1,0:T(1,128)}', space=vmem, size = 0x9000, scoped, tag = 'internal scratch']
  #allocation2 [shape = 'f32[16,32]{1,0:T(8,128)}', space=vmem, size = 0x2000, scoped, tag = 'scratch operand']
  %s0 = inlined_call_operand.vmem [shape: f32[16,32], index: 0, kind: input, shape index: {}]
  %s1 = inlined_call_operand.vmem [shape: f32[1,32], index: 1, kind: input, shape index: {}]
  %s2 = inlined_call_operand.vmem [shape: f32[1,32], index: 2, kind: input, shape index: {}]
  %s3 = inlined_call_operand.vmem [shape: f32[32,96], index: 3, kind: input, shape index: {}]
  %s4 = inlined_call_operand.vmem [shape: f32[1,96], index: 4, kind: input, shape index: {}]
  %s5 = inlined_call_operand.vmem [shape: f32[16,96], index: 5, kind: output, shape index: {}]
  %s6 = sld [smem:[#allocation0]]
  $region34: #{block_forward.5} parent=0
    _
  %s8 = ssub.s32 1, %s6
  %s9 = scalar_select 0, %s8, %s6
  // Predicated region
  $region2: #{block_forward.5} parent=0 // pred_check
    _
  $region3: #{block_forward.5} parent=0 // pred_check_branch
    %11 = sbr.rel (0) target = $region5
  $region4: #{block_forward.5} parent=0 // pred_region
    _
  $region5: #{block_forward.5} parent=0 // pred_fallthru
    _
  // Predicated region
  $region6: #{block_forward.5} parent=0 // pred_check
    _
  $region7: #{block_forward.5} parent=0 // pred_check_branch
    %13 = sbr.rel (0) target = $region9
  $region8: #{block_forward.5} parent=0 // pred_region
    _
  $region9: #{block_forward.5} parent=0 // pred_fallthru
    _
  // Predicated region
  $region10: #{block_forward.5} parent=0 // pred_check
    _
  $region11: #{block_forward.5} parent=0 // pred_check_branch
    %15 = sbr.rel (0) target = $region13
  $region12: #{block_forward.5} parent=0 // pred_region
    _
  $region13: #{block_forward.5} parent=0 // pred_fallthru
    _
  // Predicated region
  $region14: #{block_forward.5} parent=0 // pred_check
    _
  $region15: #{block_forward.5} parent=0 // pred_check_branch
    %17 = sbr.rel (0) target = $region17
  $region16: #{block_forward.5} parent=0 // pred_region
    _
  $region17: #{block_forward.5} parent=0 // pred_fallthru
    _
  // Predicated region
  $region18: #{block_forward.5} parent=0 // pred_check
    _
  $region19: #{block_forward.5} parent=0 // pred_check_branch
    %19 = sbr.rel (0) target = $region21
  $region20: #{block_forward.5} parent=0 // pred_region
    _
  $region21: #{block_forward.5} parent=0 // pred_fallthru
    _
  %p20 = scmp.eq.s32.totalorder 0, 0
  // Predicated region
  $region22: #{block_forward.5} parent=0 // pred_check
    %p21 = pneg %p20
  $region23: #{block_forward.5} parent=0 // pred_check_branch
    %23 = sbr.rel (%p21) target = $region25
  $region24: #{block_forward.5} parent=0 // pred_region
    %v24 = vld [vmem:[%s0] sm:$0xff]
    %v25 = vld [vmem:[%s0 + $0x8] sm:$0xff]
    %vm26 = vcmask 261120
    %v27 = vsel %vm26, %v24, 0.0
    %28 = vadd.xlane.f32.xlu0 %v27
    %v29 = vpop.xlane.xlu0 %28
    %v30 = vsel %vm26, %v25, 0.0
    %31 = vadd.xlane.f32.xlu0 %v30
    %v32 = vpop.xlane.xlu0 %31
    %v33 = vrcp.pop 32.0
    %v34 = vmul.f32 32.0, %v33
    %v35 = vsub.f32 1.0, %v34
    %v36 = vmul.f32 %v33, %v35
    %v37 = vadd.f32 %v33, %v36
    %vm38 = vweird.f32 %v33
    %v39 = vsel %vm38, %v33, %v37
    %v40 = vmul.f32 %v29, %v39
    %v41 = vmul.f32 %v32, %v39
    %v42 = vsub.f32 %v24, %v40
    %v43 = vsub.f32 %v25, %v41
    %v44 = vmul.f32 %v42, %v42
    %v45 = vmul.f32 %v43, %v43
    %v46 = vsel %vm26, %v44, 0.0
    %47 = vadd.xlane.f32.xlu0 %v46
    %v48 = vpop.xlane.xlu0 %47
    %v49 = vsel %vm26, %v45, 0.0
    %50 = vadd.xlane.f32.xlu0 %v49
    %v51 = vpop.xlane.xlu0 %50
    %v52 = vmul.f32 %v48, %v39
    %v53 = vmul.f32 %v51, %v39
    %v54 = vadd.f32 %v52, 1e-05
    %v55 = vadd.f32 %v53, 1e-05
    %v56 = vrsqrt.pop %v54
    %v57 = vmul.f32 %v56, %v54
    %v58 = vmul.f32 %v57, %v56
    %v59 = vmul.f32 0.5, %v58
    %v60 = vsub.f32 1.5, %v59
    %v61 = vmul.f32 %v56, %v60
    %vm62 = vweird.f32 %v54
    %vm63 = vweird.f32 %v56
    %vm64 = vmor %vm62, %vm63
    %v65 = vsel %vm64, %v56, %v61
    %v66 = vrsqrt.pop %v55
    %v67 = vmul.f32 %v66, %v55
    %v68 = vmul.f32 %v67, %v66
    %v69 = vmul.f32 0.5, %v68
    %v70 = vsub.f32 1.5, %v69
    %v71 = vmul.f32 %v66, %v70
    %vm72 = vweird.f32 %v55
    %vm73 = vweird.f32 %v66
    %vm74 = vmor %vm72, %vm73
    %v75 = vsel %vm74, %v66, %v71
    %v76 = vmul.f32 %v42, %v65
    %v77 = vmul.f32 %v43, %v75
    %v78 = vld [vmem:[%s1] sm:$0x1]
    %v80 = vperm.slane %v78, 0
    %v82 = vmul.f32 %v76, %v80
    %v83 = vmul.f32 %v77, %v80
    %v84 = vld [vmem:[%s2] sm:$0x1]
    %v86 = vperm.slane %v84, 0
    %v88 = vadd.f32 %v82, %v86
    %v89 = vadd.f32 %v83, %v86
    %90 = vst.msk [vmem:[#allocation2] sm:$0xff] %vm26, %v88
    %91 = vst.msk [vmem:[#allocation2 + $0x8] sm:$0xff] %vm26, %v89
  $region25: #{block_forward.5} parent=0 // pred_fallthru
    _
  %v92 = vld [vmem:[#allocation2] sm:$0xff]
  %v93 = vld [vmem:[#allocation2 + $0x8] sm:$0xff]
  %v94 = vld [vmem:[%s3] sm:$0xff]
  %v95 = vld [vmem:[%s3 + $0x8] sm:$0xff]
  %v96 = vld [vmem:[%s3 + $0x10] sm:$0xff]
  %v97 = vld [vmem:[%s3 + $0x18] sm:$0xff]
  %v98 = vld [vmem:[%s4] sm:$0x1]
  %v100 = vperm.slane %v98, 0
  %vm102 = vcmask 261120
  %v104 = vsel %vm102, %v92, 0
  %v107 = vsel %vm102, %v93, 0
  %109 = vmatpush.msra.mxu0 0.0
  %110 = vmatpush.msra.mxu0 0.0
  %111 = vmatpush.msra.mxu0 0.0
  %112 = vmatpush.msra.mxu0 0.0
  %113 = vmatpush.msra.mxu0 0.0
  %114 = vmatpush.msra.mxu0 0.0
  %115 = vmatpush.msra.mxu0 0.0
  %116 = vmatpush.msra.mxu0 0.0
  %117 = vmatpush.msra.mxu0 0.0
  %118 = vmatpush.msra.mxu0 0.0
  %119 = vmatpush.msra.mxu0 0.0
  %120 = vmatpush.msra.mxu0 0.0
  %121 = vmatpush.msra.mxu0 %v97
  %122 = vmatpush.msra.mxu0 %v96
  %123 = vmatpush.msra.mxu0 %v95
  %124 = vmatpush.msra.mxu0 %v94
  %125 = vmatmul.f32.gmra.mxu0 %v104
  %v126 = vpop.f32.mrf.mxu0
  %v127 = vadd.f32 %v100, %v126
  %128 = vmatmul.f32.gmra.mxu0 %v107
  %v129 = vpop.f32.mrf.mxu0
  %v130 = vadd.f32 %v100, %v129
  %131 = vdwg.mxu0
  %vm132 = vcmask 785408
  %133 = vst.msk [vmem:[%s5] sm:$0xff] %vm132, %v127
  %134 = vst.msk [vmem:[%s5 + $0x8] sm:$0xff] %vm132, %v130
  // Predicated region
  $region26: #{block_forward.5} parent=0 // pred_check
    _
  $region27: #{block_forward.5} parent=0 // pred_check_branch
    %136 = sbr.rel (0) target = $region29
  $region28: #{block_forward.5} parent=0 // pred_region
    _
  $region29: #{block_forward.5} parent=0 // pred_fallthru
    _
  // Predicated region
  $region30: #{block_forward.5} parent=0 // pred_check
    _
  $region31: #{block_forward.5} parent=0 // pred_check_branch
    %138 = sbr.rel (0) target = $region33
  $region32: #{block_forward.5} parent=0 // pred_region
    _
  $region33: #{block_forward.5} parent=0 // pred_fallthru
    _

// kernel: block_forward.7
$region0: #{block_forward.7}
  #allocation0 [shape = 'u32[]', space=smem, size = 0x4, offset = 0x4, fixed_abs, tag = 'smem constant byte address 0x4 - core index']
  #allocation1 [shape = 'u32[72,128]{1,0:T(1,128)}', space=vmem, size = 0x9000, scoped, tag = 'internal scratch']
  #allocation2 [shape = 'f32[16,32]{1,0:T(8,128)}', space=vmem, size = 0x2000, scoped, tag = 'scratch operand']
  %s0 = inlined_call_operand.vmem [shape: f32[16,32], index: 0, kind: input, shape index: {}]
  %s1 = inlined_call_operand.vmem [shape: f32[32,32], index: 1, kind: input, shape index: {}]
  %s2 = inlined_call_operand.vmem [shape: f32[1,32], index: 2, kind: input, shape index: {}]
  %s3 = inlined_call_operand.vmem [shape: f32[16,32], index: 3, kind: input, shape index: {}, may-alias: {3,4}]
  %s4 = inlined_call_operand.vmem [shape: f32[16,32], index: 4, kind: output, shape index: {}, may-alias: {3,4}]
  %s5 = sld [smem:[#allocation0]]
  $region34: #{block_forward.7} parent=0
    _
  %s7 = ssub.s32 1, %s5
  %s8 = scalar_select 0, %s7, %s5
  // Predicated region
  $region2: #{block_forward.7} parent=0 // pred_check
    _
  $region3: #{block_forward.7} parent=0 // pred_check_branch
    %10 = sbr.rel (0) target = $region5
  $region4: #{block_forward.7} parent=0 // pred_region
    _
  $region5: #{block_forward.7} parent=0 // pred_fallthru
    _
  // Predicated region
  $region6: #{block_forward.7} parent=0 // pred_check
    _
  $region7: #{block_forward.7} parent=0 // pred_check_branch
    %12 = sbr.rel (0) target = $region9
  $region8: #{block_forward.7} parent=0 // pred_region
    _
  $region9: #{block_forward.7} parent=0 // pred_fallthru
    _
  // Predicated region
  $region10: #{block_forward.7} parent=0 // pred_check
    _
  $region11: #{block_forward.7} parent=0 // pred_check_branch
    %14 = sbr.rel (0) target = $region13
  $region12: #{block_forward.7} parent=0 // pred_region
    _
  $region13: #{block_forward.7} parent=0 // pred_fallthru
    _
  // Predicated region
  $region14: #{block_forward.7} parent=0 // pred_check
    _
  $region15: #{block_forward.7} parent=0 // pred_check_branch
    %16 = sbr.rel (0) target = $region17
  $region16: #{block_forward.7} parent=0 // pred_region
    _
  $region17: #{block_forward.7} parent=0 // pred_fallthru
    _
  %p17 = scmp.eq.s32.totalorder 0, 0
  // Predicated region
  $region18: #{block_forward.7} parent=0 // pred_check
    %p18 = pneg %p17
  $region19: #{block_forward.7} parent=0 // pred_check_branch
    %20 = sbr.rel (%p18) target = $region21
  $region20: #{block_forward.7} parent=0 // pred_region
    %vm21 = vcmask 261120
    %22 = vst.msk [vmem:[#allocation2] sm:$0xff] %vm21, 0.0
    %23 = vst.msk [vmem:[#allocation2 + $0x8] sm:$0xff] %vm21, 0.0
  $region21: #{block_forward.7} parent=0 // pred_fallthru
    _
  %v24 = vld [vmem:[#allocation2] sm:$0xff]
  %v25 = vld [vmem:[#allocation2 + $0x8] sm:$0xff]
  %v26 = vld [vmem:[%s0] sm:$0xff]
  %v27 = vld [vmem:[%s0 + $0x8] sm:$0xff]
  %v28 = vld [vmem:[%s1] sm:$0xff]
  %v29 = vld [vmem:[%s1 + $0x8] sm:$0xff]
  %v30 = vld [vmem:[%s1 + $0x10] sm:$0xff]
  %v31 = vld [vmem:[%s1 + $0x18] sm:$0xff]
  %vm32 = vcmask 261120
  %v34 = vsel %vm32, %v26, 0
  %v37 = vsel %vm32, %v27, 0
  %39 = vmatpush.msra.mxu0 0.0
  %40 = vmatpush.msra.mxu0 0.0
  %41 = vmatpush.msra.mxu0 0.0
  %42 = vmatpush.msra.mxu0 0.0
  %43 = vmatpush.msra.mxu0 0.0
  %44 = vmatpush.msra.mxu0 0.0
  %45 = vmatpush.msra.mxu0 0.0
  %46 = vmatpush.msra.mxu0 0.0
  %47 = vmatpush.msra.mxu0 0.0
  %48 = vmatpush.msra.mxu0 0.0
  %49 = vmatpush.msra.mxu0 0.0
  %50 = vmatpush.msra.mxu0 0.0
  %51 = vmatpush.msra.mxu0 %v31
  %52 = vmatpush.msra.mxu0 %v30
  %53 = vmatpush.msra.mxu0 %v29
  %54 = vmatpush.msra.mxu0 %v28
  %55 = vmatmul.f32.gmra.mxu0 %v34
  %v56 = vpop.f32.mrf.mxu0
  %v57 = vadd.f32 0.0, %v56
  %58 = vmatmul.f32.gmra.mxu0 %v37
  %v59 = vpop.f32.mrf.mxu0
  %v60 = vadd.f32 0.0, %v59
  %61 = vdwg.mxu0
  %v62 = vadd.f32 %v24, %v57
  %v63 = vadd.f32 %v25, %v60
  %64 = vst.msk [vmem:[#allocation2] sm:$0xff] %vm32, %v62
  %65 = vst.msk [vmem:[#allocation2 + $0x8] sm:$0xff] %vm32, %v63
  // Predicated region
  $region22: #{block_forward.7} parent=0 // pred_check
    %p66 = pneg %p17
  $region23: #{block_forward.7} parent=0 // pred_check_branch
    %68 = sbr.rel (%p66) target = $region25
  $region24: #{block_forward.7} parent=0 // pred_region
    %v69 = vld [vmem:[#allocation2] sm:$0xff]
    %v70 = vld [vmem:[#allocation2 + $0x8] sm:$0xff]
    %v71 = vld [vmem:[%s2] sm:$0x1]
    %v73 = vperm.slane %v71, 0
    %v75 = vadd.f32 %v69, %v73
    %v76 = vadd.f32 %v70, %v73
    %v77 = vld [vmem:[%s3] sm:$0xff]
    %v78 = vld [vmem:[%s3 + $0x8] sm:$0xff]
    %v79 = vadd.f32 %v75, %v77
    %v80 = vadd.f32 %v76, %v78
    %81 = vst.msk [vmem:[%s4] sm:$0xff] %vm32, %v79
    %82 = vst.msk [vmem:[%s4 + $0x8] sm:$0xff] %vm32, %v80
  $region25: #{block_forward.7} parent=0 // pred_fallthru
    _
  // Predicated region
  $region26: #{block_forward.7} parent=0 // pred_check
    _
  $region27: #{block_forward.7} parent=0 // pred_check_branch
    %84 = sbr.rel (0) target = $region29
  $region28: #{block_forward.7} parent=0 // pred_region
    _
  $region29: #{block_forward.7} parent=0 // pred_fallthru
    _
  // Predicated region
  $region30: #{block_forward.7} parent=0 // pred_check
    _
  $region31: #{block_forward.7} parent=0 // pred_check_branch
    %86 = sbr.rel (0) target = $region33
  $region32: #{block_forward.7} parent=0 // pred_region
    _
  $region33: #{block_forward.7} parent=0 // pred_fallthru
    _

// kernel: block_forward.8
$region0: #{block_forward.8}
  #allocation0 [shape = 'u32[]', space=smem, size = 0x4, offset = 0x4, fixed_abs, tag = 'smem constant byte address 0x4 - core index']
  #allocation1 [shape = 'u32[72,128]{1,0:T(1,128)}', space=vmem, size = 0x9000, scoped, tag = 'internal scratch']
  #allocation2 [shape = 'f32[16,32]{1,0:T(8,128)}', space=vmem, size = 0x2000, scoped, tag = 'scratch operand']
  %s0 = inlined_call_operand.vmem [shape: f32[16,32], index: 0, kind: input, shape index: {}]
  %s1 = inlined_call_operand.vmem [shape: f32[1,32], index: 1, kind: input, shape index: {}]
  %s2 = inlined_call_operand.vmem [shape: f32[1,32], index: 2, kind: input, shape index: {}]
  %s3 = inlined_call_operand.vmem [shape: f32[32,128], index: 3, kind: input, shape index: {}]
  %s4 = inlined_call_operand.vmem [shape: f32[1,128], index: 4, kind: input, shape index: {}]
  %s5 = inlined_call_operand.vmem [shape: f32[16,128], index: 5, kind: output, shape index: {}]
  %s6 = sld [smem:[#allocation0]]
  $region34: #{block_forward.8} parent=0
    _
  %s8 = ssub.s32 1, %s6
  %s9 = scalar_select 0, %s8, %s6
  // Predicated region
  $region2: #{block_forward.8} parent=0 // pred_check
    _
  $region3: #{block_forward.8} parent=0 // pred_check_branch
    %11 = sbr.rel (0) target = $region5
  $region4: #{block_forward.8} parent=0 // pred_region
    _
  $region5: #{block_forward.8} parent=0 // pred_fallthru
    _
  // Predicated region
  $region6: #{block_forward.8} parent=0 // pred_check
    _
  $region7: #{block_forward.8} parent=0 // pred_check_branch
    %13 = sbr.rel (0) target = $region9
  $region8: #{block_forward.8} parent=0 // pred_region
    _
  $region9: #{block_forward.8} parent=0 // pred_fallthru
    _
  // Predicated region
  $region10: #{block_forward.8} parent=0 // pred_check
    _
  $region11: #{block_forward.8} parent=0 // pred_check_branch
    %15 = sbr.rel (0) target = $region13
  $region12: #{block_forward.8} parent=0 // pred_region
    _
  $region13: #{block_forward.8} parent=0 // pred_fallthru
    _
  // Predicated region
  $region14: #{block_forward.8} parent=0 // pred_check
    _
  $region15: #{block_forward.8} parent=0 // pred_check_branch
    %17 = sbr.rel (0) target = $region17
  $region16: #{block_forward.8} parent=0 // pred_region
    _
  $region17: #{block_forward.8} parent=0 // pred_fallthru
    _
  // Predicated region
  $region18: #{block_forward.8} parent=0 // pred_check
    _
  $region19: #{block_forward.8} parent=0 // pred_check_branch
    %19 = sbr.rel (0) target = $region21
  $region20: #{block_forward.8} parent=0 // pred_region
    _
  $region21: #{block_forward.8} parent=0 // pred_fallthru
    _
  %p20 = scmp.eq.s32.totalorder 0, 0
  // Predicated region
  $region22: #{block_forward.8} parent=0 // pred_check
    %p21 = pneg %p20
  $region23: #{block_forward.8} parent=0 // pred_check_branch
    %23 = sbr.rel (%p21) target = $region25
  $region24: #{block_forward.8} parent=0 // pred_region
    %v24 = vld [vmem:[%s0] sm:$0xff]
    %v25 = vld [vmem:[%s0 + $0x8] sm:$0xff]
    %vm26 = vcmask 261120
    %v27 = vsel %vm26, %v24, 0.0
    %28 = vadd.xlane.f32.xlu0 %v27
    %v29 = vpop.xlane.xlu0 %28
    %v30 = vsel %vm26, %v25, 0.0
    %31 = vadd.xlane.f32.xlu0 %v30
    %v32 = vpop.xlane.xlu0 %31
    %v33 = vrcp.pop 32.0
    %v34 = vmul.f32 32.0, %v33
    %v35 = vsub.f32 1.0, %v34
    %v36 = vmul.f32 %v33, %v35
    %v37 = vadd.f32 %v33, %v36
    %vm38 = vweird.f32 %v33
    %v39 = vsel %vm38, %v33, %v37
    %v40 = vmul.f32 %v29, %v39
    %v41 = vmul.f32 %v32, %v39
    %v42 = vsub.f32 %v24, %v40
    %v43 = vsub.f32 %v25, %v41
    %v44 = vmul.f32 %v42, %v42
    %v45 = vmul.f32 %v43, %v43
    %v46 = vsel %vm26, %v44, 0.0
    %47 = vadd.xlane.f32.xlu0 %v46
    %v48 = vpop.xlane.xlu0 %47
    %v49 = vsel %vm26, %v45, 0.0
    %50 = vadd.xlane.f32.xlu0 %v49
    %v51 = vpop.xlane.xlu0 %50
    %v52 = vmul.f32 %v48, %v39
    %v53 = vmul.f32 %v51, %v39
    %v54 = vadd.f32 %v52, 1e-05
    %v55 = vadd.f32 %v53, 1e-05
    %v56 = vrsqrt.pop %v54
    %v57 = vmul.f32 %v56, %v54
    %v58 = vmul.f32 %v57, %v56
    %v59 = vmul.f32 0.5, %v58
    %v60 = vsub.f32 1.5, %v59
    %v61 = vmul.f32 %v56, %v60
    %vm62 = vweird.f32 %v54
    %vm63 = vweird.f32 %v56
    %vm64 = vmor %vm62, %vm63
    %v65 = vsel %vm64, %v56, %v61
    %v66 = vrsqrt.pop %v55
    %v67 = vmul.f32 %v66, %v55
    %v68 = vmul.f32 %v67, %v66
    %v69 = vmul.f32 0.5, %v68
    %v70 = vsub.f32 1.5, %v69
    %v71 = vmul.f32 %v66, %v70
    %vm72 = vweird.f32 %v55
    %vm73 = vweird.f32 %v66
    %vm74 = vmor %vm72, %vm73
    %v75 = vsel %vm74, %v66, %v71
    %v76 = vmul.f32 %v42, %v65
    %v77 = vmul.f32 %v43, %v75
    %v78 = vld [vmem:[%s1] sm:$0x1]
    %v80 = vperm.slane %v78, 0
    %v82 = vmul.f32 %v76, %v80
    %v83 = vmul.f32 %v77, %v80
    %v84 = vld [vmem:[%s2] sm:$0x1]
    %v86 = vperm.slane %v84, 0
    %v88 = vadd.f32 %v82, %v86
    %v89 = vadd.f32 %v83, %v86
    %90 = vst.msk [vmem:[#allocation2] sm:$0xff] %vm26, %v88
    %91 = vst.msk [vmem:[#allocation2 + $0x8] sm:$0xff] %vm26, %v89
  $region25: #{block_forward.8} parent=0 // pred_fallthru
    _
  %v92 = vld [vmem:[#allocation2] sm:$0xff]
  %v93 = vld [vmem:[#allocation2 + $0x8] sm:$0xff]
  %v94 = vld [vmem:[%s3] sm:$0xff]
  %v95 = vld [vmem:[%s3 + $0x8] sm:$0xff]
  %v96 = vld [vmem:[%s3 + $0x10] sm:$0xff]
  %v97 = vld [vmem:[%s3 + $0x18] sm:$0xff]
  %v98 = vld [vmem:[%s4] sm:$0x1]
  %v100 = vperm.slane %v98, 0
  %vm102 = vcmask 261120
  %v104 = vsel %vm102, %v92, 0
  %v107 = vsel %vm102, %v93, 0
  %109 = vmatpush.msra.mxu0 0.0
  %110 = vmatpush.msra.mxu0 0.0
  %111 = vmatpush.msra.mxu0 0.0
  %112 = vmatpush.msra.mxu0 0.0
  %113 = vmatpush.msra.mxu0 0.0
  %114 = vmatpush.msra.mxu0 0.0
  %115 = vmatpush.msra.mxu0 0.0
  %116 = vmatpush.msra.mxu0 0.0
  %117 = vmatpush.msra.mxu0 0.0
  %118 = vmatpush.msra.mxu0 0.0
  %119 = vmatpush.msra.mxu0 0.0
  %120 = vmatpush.msra.mxu0 0.0
  %121 = vmatpush.msra.mxu0 %v97
  %122 = vmatpush.msra.mxu0 %v96
  %123 = vmatpush.msra.mxu0 %v95
  %124 = vmatpush.msra.mxu0 %v94
  %125 = vmatmul.f32.gmra.mxu0 %v104
  %v126 = vpop.f32.mrf.mxu0
  %v127 = vadd.f32 %v100, %v126
  %128 = vmatmul.f32.gmra.mxu0 %v107
  %v129 = vpop.f32.mrf.mxu0
  %v130 = vadd.f32 %v100, %v129
  %131 = vdwg.mxu0
  %v132 = vmul.f32 %v127, 0.5
  %v133 = vmul.f32 %v130, 0.5
  %v134 = vmul.f32 %v127, 0.70710677
  %v135 = vmul.f32 %v130, 0.70710677
  %v136 = vand.u32 2147483647, %v134
  %v137 = vand.u32 2147483647, %v135
  %v138 = vmul.f32 %v136, 0.3275911
  %v139 = vmul.f32 %v137, 0.3275911
  %v140 = vadd.f32 %v138, 1.0
  %v141 = vadd.f32 %v139, 1.0
  %v142 = vrcp.pop %v140
  %v143 = vmul.f32 %v140, %v142
  %v144 = vsub.f32 1.0, %v143
  %v145 = vmul.f32 %v142, %v144
  %v146 = vadd.f32 %v142, %v145
  %vm147 = vweird.f32 %v140
  %vm148 = vweird.f32 %v142
  %vm149 = vmor %vm147, %vm148
  %v150 = vsel %vm149, %v142, %v146
  %v151 = vand.u32 2147483647, %v140
  %vm152 = vcmp.eq.f32.partialorder %v151, 8.507059e+37
  %v153 = vand.u32 %v140, 2147483648
  %v154 = vor.u32 1.1754944e-38, %v153
  %v155 = vsel %vm152, %v154, %v150
  %v156 = vmul.f32 1.0, %v155
  %v157 = vrcp.pop %v141
  %v158 = vmul.f32 %v141, %v157
  %v159 = vsub.f32 1.0, %v158
  %v160 = vmul.f32 %v157, %v159
  %v161 = vadd.f32 %v157, %v160
  %vm162 = vweird.f32 %v141
  %vm163 = vweird.f32 %v157
  %vm164 = vmor %vm162, %vm163
  %v165 = vsel %vm164, %v157, %v161
  %v166 = vand.u32 2147483647, %v141
  %vm167 = vcmp.eq.f32.partialorder %v166, 8.507059e+37
  %v168 = vand.u32 %v141, 2147483648
  %v169 = vor.u32 1.1754944e-38, %v168
  %v170 = vsel %vm167, %v169, %v165
  %v171 = vmul.f32 1.0, %v170
  %v172 = vmul.f32 %v156, 1.0614054
  %v173 = vmul.f32 %v171, 1.0614054
  %v174 = vadd.f32 %v172, -1.4531521
  %v175 = vadd.f32 %v173, -1.4531521
  %v176 = vmul.f32 %v174, %v156
  %v177 = vmul.f32 %v175, %v171
  %v178 = vadd.f32 %v176, 1.4214138
  %v179 = vadd.f32 %v177, 1.4214138
  %v180 = vmul.f32 %v178, %v156
  %v181 = vmul.f32 %v179, %v171
  %v182 = vadd.f32 %v180, -0.28449672
  %v183 = vadd.f32 %v181, -0.28449672
  %v184 = vmul.f32 %v182, %v156
  %v185 = vmul.f32 %v183, %v171
  %v186 = vadd.f32 %v184, 0.2548296
  %v187 = vadd.f32 %v185, 0.2548296
  %v188 = vmul.f32 %v186, %v156
  %v189 = vmul.f32 %v187, %v171
  %v190 = vsub.f32 0.0, %v136
  %v191 = vsub.f32 0.0, %v137
  %v192 = vmul.f32 %v190, %v136
  %v193 = vmul.f32 %v191, %v137
  %v194 = vmul.f32 %v192, 1.442695
  %v195 = vpow.pop %v194
  %v196 = vmul.f32 %v193, 1.442695
  %v197 = vpow.pop %v196
  %v198 = vmul.f32 %v188, %v195
  %v199 = vmul.f32 %v189, %v197
  %v200 = vsub.f32 1.0, %v198
  %v201 = vsub.f32 1.0, %v199
  %vm202 = vcmp.lt.f32.partialorder %v134, 0.0
  %vm203 = vcmp.lt.f32.partialorder %v135, 0.0
  %v204 = vsub.f32 0.0, %v200
  %v205 = vsub.f32 0.0, %v201
  %v206 = vsel %vm202, %v204, %v200
  %v207 = vsel %vm203, %v205, %v201
  %v208 = vadd.f32 %v206, 1.0
  %v209 = vadd.f32 %v207, 1.0
  %v210 = vmul.f32 %v132, %v208
  %v211 = vmul.f32 %v133, %v209
  %212 = vst [vmem:[%s5] sm:$0xff] %v210
  %213 = vst [vmem:[%s5 + $0x8] sm:$0xff] %v211
  // Predicated region
  $region26: #{block_forward.8} parent=0 // pred_check
    _
  $region27: #{block_forward.8} parent=0 // pred_check_branch
    %215 = sbr.rel (0) target = $region29
  $region28: #{block_forward.8} parent=0 // pred_region
    _
  $region29: #{block_forward.8} parent=0 // pred_fallthru
    _
  // Predicated region
  $region30: #{block_forward.8} parent=0 // pred_check
    _
  $region31: #{block_forward.8} parent=0 // pred_check_branch
    %217 = sbr.rel (0) target = $region33
  $region32: #{block_forward.8} parent=0 // pred_region
    _
  $region33: #{block_forward.8} parent=0 // pred_fallthru
    _

// kernel: block_forward.9
$region0: #{block_forward.9}
  #allocation0 [shape = 'u32[]', space=smem, size = 0x4, offset = 0x4, fixed_abs, tag = 'smem constant byte address 0x4 - core index']
  #allocation1 [shape = 'u32[72,128]{1,0:T(1,128)}', space=vmem, size = 0x9000, scoped, tag = 'internal scratch']
  #allocation2 [shape = 'f32[16,32]{1,0:T(8,128)}', space=vmem, size = 0x2000, scoped, tag = 'scratch operand']
  %s0 = inlined_call_operand.vmem [shape: f32[16,128], index: 0, kind: input, shape index: {}]
  %s1 = inlined_call_operand.vmem [shape: f32[128,32], index: 1, kind: input, shape index: {}]
  %s2 = inlined_call_operand.vmem [shape: f32[1,32], index: 2, kind: input, shape index: {}]
  %s3 = inlined_call_operand.vmem [shape: f32[16,32], index: 3, kind: input, shape index: {}, may-alias: {3,4}]
  %s4 = inlined_call_operand.vmem [shape: f32[16,32], index: 4, kind: output, shape index: {}, may-alias: {3,4}]
  %s5 = sld [smem:[#allocation0]]
  $region34: #{block_forward.9} parent=0
    _
  %s7 = ssub.s32 1, %s5
  %s8 = scalar_select 0, %s7, %s5
  // Predicated region
  $region2: #{block_forward.9} parent=0 // pred_check
    _
  $region3: #{block_forward.9} parent=0 // pred_check_branch
    %10 = sbr.rel (0) target = $region5
  $region4: #{block_forward.9} parent=0 // pred_region
    _
  $region5: #{block_forward.9} parent=0 // pred_fallthru
    _
  // Predicated region
  $region6: #{block_forward.9} parent=0 // pred_check
    _
  $region7: #{block_forward.9} parent=0 // pred_check_branch
    %12 = sbr.rel (0) target = $region9
  $region8: #{block_forward.9} parent=0 // pred_region
    _
  $region9: #{block_forward.9} parent=0 // pred_fallthru
    _
  // Predicated region
  $region10: #{block_forward.9} parent=0 // pred_check
    _
  $region11: #{block_forward.9} parent=0 // pred_check_branch
    %14 = sbr.rel (0) target = $region13
  $region12: #{block_forward.9} parent=0 // pred_region
    _
  $region13: #{block_forward.9} parent=0 // pred_fallthru
    _
  // Predicated region
  $region14: #{block_forward.9} parent=0 // pred_check
    _
  $region15: #{block_forward.9} parent=0 // pred_check_branch
    %16 = sbr.rel (0) target = $region17
  $region16: #{block_forward.9} parent=0 // pred_region
    _
  $region17: #{block_forward.9} parent=0 // pred_fallthru
    _
  %p17 = scmp.eq.s32.totalorder 0, 0
  // Predicated region
  $region18: #{block_forward.9} parent=0 // pred_check
    %p18 = pneg %p17
  $region19: #{block_forward.9} parent=0 // pred_check_branch
    %20 = sbr.rel (%p18) target = $region21
  $region20: #{block_forward.9} parent=0 // pred_region
    %vm21 = vcmask 261120
    %22 = vst.msk [vmem:[#allocation2] sm:$0xff] %vm21, 0.0
    %23 = vst.msk [vmem:[#allocation2 + $0x8] sm:$0xff] %vm21, 0.0
  $region21: #{block_forward.9} parent=0 // pred_fallthru
    _
  %v24 = vld [vmem:[#allocation2] sm:$0xff]
  %v25 = vld [vmem:[#allocation2 + $0x8] sm:$0xff]
  %v26 = vld [vmem:[%s0] sm:$0xff]
  %v27 = vld [vmem:[%s0 + $0x8] sm:$0xff]
  %v28 = vld [vmem:[%s1] sm:$0xff]
  %v29 = vld [vmem:[%s1 + $0x8] sm:$0xff]
  %v30 = vld [vmem:[%s1 + $0x10] sm:$0xff]
  %v31 = vld [vmem:[%s1 + $0x18] sm:$0xff]
  %v32 = vld [vmem:[%s1 + $0x20] sm:$0xff]
  %v33 = vld [vmem:[%s1 + $0x28] sm:$0xff]
  %v34 = vld [vmem:[%s1 + $0x30] sm:$0xff]
  %v35 = vld [vmem:[%s1 + $0x38] sm:$0xff]
  %v36 = vld [vmem:[%s1 + $0x40] sm:$0xff]
  %v37 = vld [vmem:[%s1 + $0x48] sm:$0xff]
  %v38 = vld [vmem:[%s1 + $0x50] sm:$0xff]
  %v39 = vld [vmem:[%s1 + $0x58] sm:$0xff]
  %v40 = vld [vmem:[%s1 + $0x60] sm:$0xff]
  %v41 = vld [vmem:[%s1 + $0x68] sm:$0xff]
  %v42 = vld [vmem:[%s1 + $0x70] sm:$0xff]
  %v43 = vld [vmem:[%s1 + $0x78] sm:$0xff]
  %44 = vmatpush.msra.mxu0 %v43
  %45 = vmatpush.msra.mxu0 %v42
  %46 = vmatpush.msra.mxu0 %v41
  %47 = vmatpush.msra.mxu0 %v40
  %48 = vmatpush.msra.mxu0 %v39
  %49 = vmatpush.msra.mxu0 %v38
  %50 = vmatpush.msra.mxu0 %v37
  %51 = vmatpush.msra.mxu0 %v36
  %52 = vmatpush.msra.mxu0 %v35
  %53 = vmatpush.msra.mxu0 %v34
  %54 = vmatpush.msra.mxu0 %v33
  %55 = vmatpush.msra.mxu0 %v32
  %56 = vmatpush.msra.mxu0 %v31
  %57 = vmatpush.msra.mxu0 %v30
  %58 = vmatpush.msra.mxu0 %v29
  %59 = vmatpush.msra.mxu0 %v28
  %60 = vmatmul.f32.gmra.mxu0 %v26
  %v61 = vpop.f32.mrf.mxu0
  %v62 = vadd.f32 0.0, %v61
  %63 = vmatmul.f32.gmra.mxu0 %v27
  %v64 = vpop.f32.mrf.mxu0
  %v65 = vadd.f32 0.0, %v64
  %66 = vdwg.mxu0
  %v67 = vadd.f32 %v24, %v62
  %v68 = vadd.f32 %v25, %v65
  %vm69 = vcmask 261120
  %70 = vst.msk [vmem:[#allocation2] sm:$0xff] %vm69, %v67
  %71 = vst.msk [vmem:[#allocation2 + $0x8] sm:$0xff] %vm69, %v68
  // Predicated region
  $region22: #{block_forward.9} parent=0 // pred_check
    %p72 = pneg %p17
  $region23: #{block_forward.9} parent=0 // pred_check_branch
    %74 = sbr.rel (%p72) target = $region25
  $region24: #{block_forward.9} parent=0 // pred_region
    %v75 = vld [vmem:[#allocation2] sm:$0xff]
    %v76 = vld [vmem:[#allocation2 + $0x8] sm:$0xff]
    %v77 = vld [vmem:[%s2] sm:$0x1]
    %v79 = vperm.slane %v77, 0
    %v81 = vadd.f32 %v75, %v79
    %v82 = vadd.f32 %v76, %v79
    %v83 = vld [vmem:[%s3] sm:$0xff]
    %v84 = vld [vmem:[%s3 + $0x8] sm:$0xff]
    %v85 = vadd.f32 %v81, %v83
    %v86 = vadd.f32 %v82, %v84
    %87 = vst.msk [vmem:[%s4] sm:$0xff] %vm69, %v85
    %88 = vst.msk [vmem:[%s4 + $0x8] sm:$0xff] %vm69, %v86
  $region25: #{block_forward.9} parent=0 // pred_fallthru
    _
  // Predicated region
  $region26: #{block_forward.9} parent=0 // pred_check
    _
  $region27: #{block_forward.9} parent=0 // pred_check_branch
    %90 = sbr.rel (0) target = $region29
  $region28: #{block_forward.9} parent=0 // pred_region
    _
  $region29: #{block_forward.9} parent=0 // pred_fallthru
    _
  // Predicated region
  $region30: #{block_forward.9} parent=0 // pred_check
    _
  $region31: #{block_forward.9} parent=0 // pred_check_branch
    %92 = sbr.rel (0) target = $region33
  $region32: #{block_forward.9} parent=0 // pred_region
    _
  $region33: #{block_forward.9} parent=0 // pred_fallthru
    _

// kernel: block_forward.6
$region0: #{block_forward.6}
  #allocation0 [shape = 'u32[]', space=smem, size = 0x4, offset = 0x4, fixed_abs, tag = 'smem constant byte address 0x4 - core index']
  #allocation1 [shape = 'u32[72,128]{1,0:T(1,128)}', space=vmem, size = 0x9000, scoped, tag = 'internal scratch']
  #allocation2 [shape = 'f32[8,8,1]{2,1,0:T(8,128)}', space=vmem, size = 0x8000, scoped, tag = 'scratch operand']
  #allocation3 [shape = 'f32[8,8,1]{2,1,0:T(8,128)}', space=vmem, size = 0x8000, scoped, tag = 'scratch operand']
  #allocation4 [shape = 'f32[8,8,8]{2,1,0:T(8,128)}', space=vmem, size = 0x8000, scoped, tag = 'scratch operand']
  %s0 = inlined_call_operand.vmem [shape: f32[8,8,8], index: 0, kind: input, shape index: {}]
  %s1 = inlined_call_operand.vmem [shape: f32[8,8,8], index: 1, kind: input, shape index: {}]
  %s2 = inlined_call_operand.vmem [shape: f32[8,8,8], index: 2, kind: input, shape index: {}]
  %s3 = inlined_call_operand.vmem [shape: f32[8,8,8], index: 3, kind: output, shape index: {}]
  %s4 = sld [smem:[#allocation0]]
  $region34: #{block_forward.6} parent=0
    _
  %s6 = ssub.s32 1, %s4
  %s7 = scalar_select 0, %s6, %s4
  // Predicated region
  $region2: #{block_forward.6} parent=0 // pred_check
    _
  $region3: #{block_forward.6} parent=0 // pred_check_branch
    %9 = sbr.rel (0) target = $region5
  $region4: #{block_forward.6} parent=0 // pred_region
    _
  $region5: #{block_forward.6} parent=0 // pred_fallthru
    _
  // Predicated region
  $region6: #{block_forward.6} parent=0 // pred_check
    _
  $region7: #{block_forward.6} parent=0 // pred_check_branch
    %11 = sbr.rel (0) target = $region9
  $region8: #{block_forward.6} parent=0 // pred_region
    _
  $region9: #{block_forward.6} parent=0 // pred_fallthru
    _
  // Predicated region
  $region10: #{block_forward.6} parent=0 // pred_check
    _
  $region11: #{block_forward.6} parent=0 // pred_check_branch
    %13 = sbr.rel (0) target = $region13
  $region12: #{block_forward.6} parent=0 // pred_region
    _
  $region13: #{block_forward.6} parent=0 // pred_fallthru
    _
  %p14 = scmp.eq.s32.totalorder 0, 0
  // Predicated region
  $region14: #{block_forward.6} parent=0 // pred_check
    %p15 = pneg %p14
  $region15: #{block_forward.6} parent=0 // pred_check_branch
    %17 = sbr.rel (%p15) target = $region17
  $region16: #{block_forward.6} parent=0 // pred_region
    %vm18 = vcmask 7168
    %19 = vst.msk [vmem:[#allocation2] sm:$0xff] %vm18, -inf
    %20 = vst.msk [vmem:[#allocation2 + $0x8] sm:$0xff] %vm18, -inf
    %21 = vst.msk [vmem:[#allocation2 + $0x10] sm:$0xff] %vm18, -inf
    %22 = vst.msk [vmem:[#allocation2 + $0x18] sm:$0xff] %vm18, -inf
    %23 = vst.msk [vmem:[#allocation2 + $0x20] sm:$0xff] %vm18, -inf
    %24 = vst.msk [vmem:[#allocation2 + $0x28] sm:$0xff] %vm18, -inf
    %25 = vst.msk [vmem:[#allocation2 + $0x30] sm:$0xff] %vm18, -inf
    %26 = vst.msk [vmem:[#allocation2 + $0x38] sm:$0xff] %vm18, -inf
    %27 = vst.msk [vmem:[#allocation3] sm:$0xff] %vm18, 0.0
    %28 = vst.msk [vmem:[#allocation3 + $0x8] sm:$0xff] %vm18, 0.0
    %29 = vst.msk [vmem:[#allocation3 + $0x10] sm:$0xff] %vm18, 0.0
    %30 = vst.msk [vmem:[#allocation3 + $0x18] sm:$0xff] %vm18, 0.0
    %31 = vst.msk [vmem:[#allocation3 + $0x20] sm:$0xff] %vm18, 0.0
    %32 = vst.msk [vmem:[#allocation3 + $0x28] sm:$0xff] %vm18, 0.0
    %33 = vst.msk [vmem:[#allocation3 + $0x30] sm:$0xff] %vm18, 0.0
    %34 = vst.msk [vmem:[#allocation3 + $0x38] sm:$0xff] %vm18, 0.0
    %vm35 = vcmask 64512
    %36 = vst.msk [vmem:[#allocation4] sm:$0xff] %vm35, 0.0
    %37 = vst.msk [vmem:[#allocation4 + $0x8] sm:$0xff] %vm35, 0.0
    %38 = vst.msk [vmem:[#allocation4 + $0x10] sm:$0xff] %vm35, 0.0
    %39 = vst.msk [vmem:[#allocation4 + $0x18] sm:$0xff] %vm35, 0.0
    %40 = vst.msk [vmem:[#allocation4 + $0x20] sm:$0xff] %vm35, 0.0
    %41 = vst.msk [vmem:[#allocation4 + $0x28] sm:$0xff] %vm35, 0.0
    %42 = vst.msk [vmem:[#allocation4 + $0x30] sm:$0xff] %vm35, 0.0
    %43 = vst.msk [vmem:[#allocation4 + $0x38] sm:$0xff] %vm35, 0.0
  $region17: #{block_forward.6} parent=0 // pred_fallthru
    _
  %p44 = scmp.lt.s32.totalorder 0, 0
  // Predicated region
  $region18: #{block_forward.6} parent=0 // pred_check
    %p45 = pneg %p44
  $region19: #{block_forward.6} parent=0 // pred_check_branch
    %47 = sbr.rel (%p45) target = $region21
  $region20: #{block_forward.6} parent=0 // pred_region
    %v48 = vld [vmem:[%s0] sm:$0xff]
    %v49 = vld [vmem:[%s0 + $0x8] sm:$0xff]
    %v50 = vld [vmem:[%s0 + $0x10] sm:$0xff]
    %v51 = vld [vmem:[%s0 + $0x18] sm:$0xff]
    %v52 = vld [vmem:[%s0 + $0x20] sm:$0xff]
    %v53 = vld [vmem:[%s0 + $0x28] sm:$0xff]
    %v54 = vld [vmem:[%s0 + $0x30] sm:$0xff]
    %v55 = vld [vmem:[%s0 + $0x38] sm:$0xff]
    %v56 = vld [vmem:[%s1] sm:$0xff]
    %v57 = vld [vmem:[%s1 + $0x8] sm:$0xff]
    %v58 = vld [vmem:[%s1 + $0x10] sm:$0xff]
    %v59 = vld [vmem:[%s1 + $0x18] sm:$0xff]
    %v60 = vld [vmem:[%s1 + $0x20] sm:$0xff]
    %v61 = vld [vmem:[%s1 + $0x28] sm:$0xff]
    %v62 = vld [vmem:[%s1 + $0x30] sm:$0xff]
    %v63 = vld [vmem:[%s1 + $0x38] sm:$0xff]
    %vm64 = vcmask 64512
    %v66 = vsel %vm64, %v48, 0
    %v69 = vsel %vm64, %v56, 0
    %71 = vmatpush.xpose.msra.mxu0 0.0
    %72 = vmatpush.xpose.msra.mxu0 0.0
    %73 = vmatpush.xpose.msra.mxu0 0.0
    %74 = vmatpush.xpose.msra.mxu0 0.0
    %75 = vmatpush.xpose.msra.mxu0 0.0
    %76 = vmatpush.xpose.msra.mxu0 0.0
    %77 = vmatpush.xpose.msra.mxu0 0.0
    %78 = vmatpush.xpose.msra.mxu0 0.0
    %79 = vmatpush.xpose.msra.mxu0 0.0
    %80 = vmatpush.xpose.msra.mxu0 0.0
    %81 = vmatpush.xpose.msra.mxu0 0.0
    %82 = vmatpush.xpose.msra.mxu0 0.0
    %83 = vmatpush.xpose.msra.mxu0 0.0
    %84 = vmatpush.xpose.msra.mxu0 0.0
    %85 = vmatpush.xpose.msra.mxu0 0.0
    %86 = vmatpush.xpose.msra.mxu0 %v69
    %87 = vmatmul.f32.gmra.mxu0 %v66
    %v88 = vpop.f32.mrf.mxu0
    %v89 = vadd.f32 0.0, %v88
    %90 = vdwg.mxu0
    %v92 = vsel %vm64, %v49, 0
    %v95 = vsel %vm64, %v57, 0
    %97 = vmatpush.xpose.msra.mxu0 0.0
    %98 = vmatpush.xpose.msra.mxu0 0.0
    %99 = vmatpush.xpose.msra.mxu0 0.0
    %100 = vmatpush.xpose.msra.mxu0 0.0
    %101 = vmatpush.xpose.msra.mxu0 0.0
    %102 = vmatpush.xpose.msra.mxu0 0.0
    %103 = vmatpush.xpose.msra.mxu0 0.0
    %104 = vmatpush.xpose.msra.mxu0 0.0
    %105 = vmatpush.xpose.msra.mxu0 0.0
    %106 = vmatpush.xpose.msra.mxu0 0.0
    %107 = vmatpush.xpose.msra.mxu0 0.0
    %108 = vmatpush.xpose.msra.mxu0 0.0
    %109 = vmatpush.xpose.msra.mxu0 0.0
    %110 = vmatpush.xpose.msra.mxu0 0.0
    %111 = vmatpush.xpose.msra.mxu0 0.0
    %112 = vmatpush.xpose.msra.mxu0 %v95
    %113 = vmatmul.f32.gmra.mxu0 %v92
    %v114 = vpop.f32.mrf.mxu0
    %v115 = vadd.f32 0.0, %v114
    %116 = vdwg.mxu0
    %v118 = vsel %vm64, %v50, 0
    %v121 = vsel %vm64, %v58, 0
    %123 = vmatpush.xpose.msra.mxu0 0.0
    %124 = vmatpush.xpose.msra.mxu0 0.0
    %125 = vmatpush.xpose.msra.mxu0 0.0
    %126 = vmatpush.xpose.msra.mxu0 0.0
    %127 = vmatpush.xpose.msra.mxu0 0.0
    %128 = vmatpush.xpose.msra.mxu0 0.0
    %129 = vmatpush.xpose.msra.mxu0 0.0
    %130 = vmatpush.xpose.msra.mxu0 0.0
    %131 = vmatpush.xpose.msra.mxu0 0.0
    %132 = vmatpush.xpose.msra.mxu0 0.0
    %133 = vmatpush.xpose.msra.mxu0 0.0
    %134 = vmatpush.xpose.msra.mxu0 0.0
    %135 = vmatpush.xpose.msra.mxu0 0.0
    %136 = vmatpush.xpose.msra.mxu0 0.0
    %137 = vmatpush.xpose.msra.mxu0 0.0
    %138 = vmatpush.xpose.msra.mxu0 %v121
    %139 = vmatmul.f32.gmra.mxu0 %v118
    %v140 = vpop.f32.mrf.mxu0
    %v141 = vadd.f32 0.0, %v140
    %142 = vdwg.mxu0
    %v144 = vsel %vm64, %v51, 0
    %v147 = vsel %vm64, %v59, 0
    %149 = vmatpush.xpose.msra.mxu0 0.0
    %150 = vmatpush.xpose.msra.mxu0 0.0
    %151 = vmatpush.xpose.msra.mxu0 0.0
    %152 = vmatpush.xpose.msra.mxu0 0.0
    %153 = vmatpush.xpose.msra.mxu0 0.0
    %154 = vmatpush.xpose.msra.mxu0 0.0
    %155 = vmatpush.xpose.msra.mxu0 0.0
    %156 = vmatpush.xpose.msra.mxu0 0.0
    %157 = vmatpush.xpose.msra.mxu0 0.0
    %158 = vmatpush.xpose.msra.mxu0 0.0
    %159 = vmatpush.xpose.msra.mxu0 0.0
    %160 = vmatpush.xpose.msra.mxu0 0.0
    %161 = vmatpush.xpose.msra.mxu0 0.0
    %162 = vmatpush.xpose.msra.mxu0 0.0
    %163 = vmatpush.xpose.msra.mxu0 0.0
    %164 = vmatpush.xpose.msra.mxu0 %v147
    %165 = vmatmul.f32.gmra.mxu0 %v144
    %v166 = vpop.f32.mrf.mxu0
    %v167 = vadd.f32 0.0, %v166
    %168 = vdwg.mxu0
    %v170 = vsel %vm64, %v52, 0
    %v173 = vsel %vm64, %v60, 0
    %175 = vmatpush.xpose.msra.mxu0 0.0
    %176 = vmatpush.xpose.msra.mxu0 0.0
    %177 = vmatpush.xpose.msra.mxu0 0.0
    %178 = vmatpush.xpose.msra.mxu0 0.0
    %179 = vmatpush.xpose.msra.mxu0 0.0
    %180 = vmatpush.xpose.msra.mxu0 0.0
    %181 = vmatpush.xpose.msra.mxu0 0.0
    %182 = vmatpush.xpose.msra.mxu0 0.0
    %183 = vmatpush.xpose.msra.mxu0 0.0
    %184 = vmatpush.xpose.msra.mxu0 0.0
    %185 = vmatpush.xpose.msra.mxu0 0.0
    %186 = vmatpush.xpose.msra.mxu0 0.0
    %187 = vmatpush.xpose.msra.mxu0 0.0
    %188 = vmatpush.xpose.msra.mxu0 0.0
    %189 = vmatpush.xpose.msra.mxu0 0.0
    %190 = vmatpush.xpose.msra.mxu0 %v173
    %191 = vmatmul.f32.gmra.mxu0 %v170
    %v192 = vpop.f32.mrf.mxu0
    %v193 = vadd.f32 0.0, %v192
    %194 = vdwg.mxu0
    %v196 = vsel %vm64, %v53, 0
    %v199 = vsel %vm64, %v61, 0
    %201 = vmatpush.xpose.msra.mxu0 0.0
    %202 = vmatpush.xpose.msra.mxu0 0.0
    %203 = vmatpush.xpose.msra.mxu0 0.0
    %204 = vmatpush.xpose.msra.mxu0 0.0
    %205 = vmatpush.xpose.msra.mxu0 0.0
    %206 = vmatpush.xpose.msra.mxu0 0.0
    %207 = vmatpush.xpose.msra.mxu0 0.0
    %208 = vmatpush.xpose.msra.mxu0 0.0
    %209 = vmatpush.xpose.msra.mxu0 0.0
    %210 = vmatpush.xpose.msra.mxu0 0.0
    %211 = vmatpush.xpose.msra.mxu0 0.0
    %212 = vmatpush.xpose.msra.mxu0 0.0
    %213 = vmatpush.xpose.msra.mxu0 0.0
    %214 = vmatpush.xpose.msra.mxu0 0.0
    %215 = vmatpush.xpose.msra.mxu0 0.0
    %216 = vmatpush.xpose.msra.mxu0 %v199
    %217 = vmatmul.f32.gmra.mxu0 %v196
    %v218 = vpop.f32.mrf.mxu0
    %v219 = vadd.f32 0.0, %v218
    %220 = vdwg.mxu0
    %v222 = vsel %vm64, %v54, 0
    %v225 = vsel %vm64, %v62, 0
    %227 = vmatpush.xpose.msra.mxu0 0.0
    %228 = vmatpush.xpose.msra.mxu0 0.0
    %229 = vmatpush.xpose.msra.mxu0 0.0
    %230 = vmatpush.xpose.msra.mxu0 0.0
    %231 = vmatpush.xpose.msra.mxu0 0.0
    %232 = vmatpush.xpose.msra.mxu0 0.0
    %233 = vmatpush.xpose.msra.mxu0 0.0
    %234 = vmatpush.xpose.msra.mxu0 0.0
    %235 = vmatpush.xpose.msra.mxu0 0.0
    %236 = vmatpush.xpose.msra.mxu0 0.0
    %237 = vmatpush.xpose.msra.mxu0 0.0
    %238 = vmatpush.xpose.msra.mxu0 0.0
    %239 = vmatpush.xpose.msra.mxu0 0.0
    %240 = vmatpush.xpose.msra.mxu0 0.0
    %241 = vmatpush.xpose.msra.mxu0 0.0
    %242 = vmatpush.xpose.msra.mxu0 %v225
    %243 = vmatmul.f32.gmra.mxu0 %v222
    %v244 = vpop.f32.mrf.mxu0
    %v245 = vadd.f32 0.0, %v244
    %246 = vdwg.mxu0
    %v248 = vsel %vm64, %v55, 0
    %v251 = vsel %vm64, %v63, 0
    %253 = vmatpush.xpose.msra.mxu0 0.0
    %254 = vmatpush.xpose.msra.mxu0 0.0
    %255 = vmatpush.xpose.msra.mxu0 0.0
    %256 = vmatpush.xpose.msra.mxu0 0.0
    %257 = vmatpush.xpose.msra.mxu0 0.0
    %258 = vmatpush.xpose.msra.mxu0 0.0
    %259 = vmatpush.xpose.msra.mxu0 0.0
    %260 = vmatpush.xpose.msra.mxu0 0.0
    %261 = vmatpush.xpose.msra.mxu0 0.0
    %262 = vmatpush.xpose.msra.mxu0 0.0
    %263 = vmatpush.xpose.msra.mxu0 0.0
    %264 = vmatpush.xpose.msra.mxu0 0.0
    %265 = vmatpush.xpose.msra.mxu0 0.0
    %266 = vmatpush.xpose.msra.mxu0 0.0
    %267 = vmatpush.xpose.msra.mxu0 0.0
    %268 = vmatpush.xpose.msra.mxu0 %v251
    %269 = vmatmul.f32.gmra.mxu0 %v248
    %v270 = vpop.f32.mrf.mxu0
    %v271 = vadd.f32 0.0, %v270
    %272 = vdwg.mxu0
    %v273 = vld [vmem:[#allocation2] sm:$0xff]
    %v274 = vld [vmem:[#allocation2 + $0x8] sm:$0xff]
    %v275 = vld [vmem:[#allocation2 + $0x10] sm:$0xff]
    %v276 = vld [vmem:[#allocation2 + $0x18] sm:$0xff]
    %v277 = vld [vmem:[#allocation2 + $0x20] sm:$0xff]
    %v278 = vld [vmem:[#allocation2 + $0x28] sm:$0xff]
    %v279 = vld [vmem:[#allocation2 + $0x30] sm:$0xff]
    %v280 = vld [vmem:[#allocation2 + $0x38] sm:$0xff]
    %v281 = vsel %vm64, %v89, -inf
    %282 = vmax.xlane.f32.xlu0 %v281
    %v283 = vpop.xlane.xlu0 %282
    %v284 = vsel %vm64, %v115, -inf
    %285 = vmax.xlane.f32.xlu0 %v284
    %v286 = vpop.xlane.xlu0 %285
    %v287 = vsel %vm64, %v141, -inf
    %288 = vmax.xlane.f32.xlu0 %v287
    %v289 = vpop.xlane.xlu0 %288
    %v290 = vsel %vm64, %v167, -inf
    %291 = vmax.xlane.f32.xlu0 %v290
    %v292 = vpop.xlane.xlu0 %291
    %v293 = vsel %vm64, %v193, -inf
    %294 = vmax.xlane.f32.xlu0 %v293
    %v295 = vpop.xlane.xlu0 %294
    %v296 = vsel %vm64, %v219, -inf
    %297 = vmax.xlane.f32.xlu0 %v296
    %v298 = vpop.xlane.xlu0 %297
    %v299 = vsel %vm64, %v245, -inf
    %300 = vmax.xlane.f32.xlu0 %v299
    %v301 = vpop.xlane.xlu0 %300
    %v302 = vsel %vm64, %v271, -inf
    %303 = vmax.xlane.f32.xlu0 %v302
    %v304 = vpop.xlane.xlu0 %303
    %v305 = vmax.f32 %v273, %v283
    %v306 = vmax.f32 %v274, %v286
    %v307 = vmax.f32 %v275, %v289
    %v308 = vmax.f32 %v276, %v292
    %v309 = vmax.f32 %v277, %v295
    %v310 = vmax.f32 %v278, %v298
    %v311 = vmax.f32 %v279, %v301
    %v312 = vmax.f32 %v280, %v304
    %v313 = vsub.f32 %v273, %v305
    %v314 = vsub.f32 %v274, %v306
    %v315 = vsub.f32 %v275, %v307
    %v316 = vsub.f32 %v276, %v308
    %v317 = vsub.f32 %v277, %v309
    %v318 = vsub.f32 %v278, %v310
    %v319 = vsub.f32 %v279, %v311
    %v320 = vsub.f32 %v280, %v312
    %v321 = vmul.f32 %v313, 1.442695
    %v322 = vpow.pop %v321
    %v323 = vmul.f32 %v314, 1.442695
    %v324 = vpow.pop %v323
    %v325 = vmul.f32 %v315, 1.442695
    %v326 = vpow.pop %v325
    %v327 = vmul.f32 %v316, 1.442695
    %v328 = vpow.pop %v327
    %v329 = vmul.f32 %v317, 1.442695
    %v330 = vpow.pop %v329
    %v331 = vmul.f32 %v318, 1.442695
    %v332 = vpow.pop %v331
    %v333 = vmul.f32 %v319, 1.442695
    %v334 = vpow.pop %v333
    %v335 = vmul.f32 %v320, 1.442695
    %v336 = vpow.pop %v335
    %338 = vset.pattern.permute.xlu0 0
    %339 = vperm.xlu0 %338, %v305
    %v340 = vpop.permute.xlu0 %339
    %343 = vset.pattern.permute.xlu0 0
    %344 = vperm.xlu0 %343, %v306
    %v345 = vpop.permute.xlu0 %344
    %348 = vset.pattern.permute.xlu0 0
    %349 = vperm.xlu0 %348, %v307
    %v350 = vpop.permute.xlu0 %349
    %353 = vset.pattern.permute.xlu0 0
    %354 = vperm.xlu0 %353, %v308
    %v355 = vpop.permute.xlu0 %354
    %358 = vset.pattern.permute.xlu0 0
    %359 = vperm.xlu0 %358, %v309
    %v360 = vpop.permute.xlu0 %359
    %363 = vset.pattern.permute.xlu0 0
    %364 = vperm.xlu0 %363, %v310
    %v365 = vpop.permute.xlu0 %364
    %368 = vset.pattern.permute.xlu0 0
    %369 = vperm.xlu0 %368, %v311
    %v370 = vpop.permute.xlu0 %369
    %373 = vset.pattern.permute.xlu0 0
    %374 = vperm.xlu0 %373, %v312
    %v375 = vpop.permute.xlu0 %374
    %v377 = vsub.f32 %v89, %v340
    %v378 = vsub.f32 %v115, %v345
    %v379 = vsub.f32 %v141, %v350
    %v380 = vsub.f32 %v167, %v355
    %v381 = vsub.f32 %v193, %v360
    %v382 = vsub.f32 %v219, %v365
    %v383 = vsub.f32 %v245, %v370
    %v384 = vsub.f32 %v271, %v375
    %v385 = vmul.f32 %v377, 1.442695
    %v386 = vpow.pop %v385
    %v387 = vmul.f32 %v378, 1.442695
    %v388 = vpow.pop %v387
    %v389 = vmul.f32 %v379, 1.442695
    %v390 = vpow.pop %v389
    %v391 = vmul.f32 %v380, 1.442695
    %v392 = vpow.pop %v391
    %v393 = vmul.f32 %v381, 1.442695
    %v394 = vpow.pop %v393
    %v395 = vmul.f32 %v382, 1.442695
    %v396 = vpow.pop %v395
    %v397 = vmul.f32 %v383, 1.442695
    %v398 = vpow.pop %v397
    %v399 = vmul.f32 %v384, 1.442695
    %v400 = vpow.pop %v399
    %v401 = vld [vmem:[#allocation3] sm:$0xff]
    %v402 = vld [vmem:[#allocation3 + $0x8] sm:$0xff]
    %v403 = vld [vmem:[#allocation3 + $0x10] sm:$0xff]
    %v404 = vld [vmem:[#allocation3 + $0x18] sm:$0xff]
    %v405 = vld [vmem:[#allocation3 + $0x20] sm:$0xff]
    %v406 = vld [vmem:[#allocation3 + $0x28] sm:$0xff]
    %v407 = vld [vmem:[#allocation3 + $0x30] sm:$0xff]
    %v408 = vld [vmem:[#allocation3 + $0x38] sm:$0xff]
    %v409 = vmul.f32 %v322, %v401
    %v410 = vmul.f32 %v324, %v402
    %v411 = vmul.f32 %v326, %v403
    %v412 = vmul.f32 %v328, %v404
    %v413 = vmul.f32 %v330, %v405
    %v414 = vmul.f32 %v332, %v406
    %v415 = vmul.f32 %v334, %v407
    %v416 = vmul.f32 %v336, %v408
    %v417 = vsel %vm64, %v386, 0.0
    %418 = vadd.xlane.f32.xlu0 %v417
    %v419 = vpop.xlane.xlu0 %418
    %v420 = vsel %vm64, %v388, 0.0
    %421 = vadd.xlane.f32.xlu0 %v420
    %v422 = vpop.xlane.xlu0 %421
    %v423 = vsel %vm64, %v390, 0.0
    %424 = vadd.xlane.f32.xlu0 %v423
    %v425 = vpop.xlane.xlu0 %424
    %v426 = vsel %vm64, %v392, 0.0
    %427 = vadd.xlane.f32.xlu0 %v426
    %v428 = vpop.xlane.xlu0 %427
    %v429 = vsel %vm64, %v394, 0.0
    %430 = vadd.xlane.f32.xlu0 %v429
    %v431 = vpop.xlane.xlu0 %430
    %v432 = vsel %vm64, %v396, 0.0
    %433 = vadd.xlane.f32.xlu0 %v432
    %v434 = vpop.xlane.xlu0 %433
    %v435 = vsel %vm64, %v398, 0.0
    %436 = vadd.xlane.f32.xlu0 %v435
    %v437 = vpop.xlane.xlu0 %436
    %v438 = vsel %vm64, %v400, 0.0
    %439 = vadd.xlane.f32.xlu0 %v438
    %v440 = vpop.xlane.xlu0 %439
    %v441 = vadd.f32 %v409, %v419
    %v442 = vadd.f32 %v410, %v422
    %v443 = vadd.f32 %v411, %v425
    %v444 = vadd.f32 %v412, %v428
    %v445 = vadd.f32 %v413, %v431
    %v446 = vadd.f32 %v414, %v434
    %v447 = vadd.f32 %v415, %v437
    %v448 = vadd.f32 %v416, %v440
    %vm449 = vcmask 7168
    %450 = vst.msk [vmem:[#allocation3] sm:$0xff] %vm449, %v441
    %451 = vst.msk [vmem:[#allocation3 + $0x8] sm:$0xff] %vm449, %v442
    %452 = vst.msk [vmem:[#allocation3 + $0x10] sm:$0xff] %vm449, %v443
    %453 = vst.msk [vmem:[#allocation3 + $0x18] sm:$0xff] %vm449, %v444
    %454 = vst.msk [vmem:[#allocation3 + $0x20] sm:$0xff] %vm449, %v445
    %455 = vst.msk [vmem:[#allocation3 + $0x28] sm:$0xff] %vm449, %v446
    %456 = vst.msk [vmem:[#allocation3 + $0x30] sm:$0xff] %vm449, %v447
    %457 = vst.msk [vmem:[#allocation3 + $0x38] sm:$0xff] %vm449, %v448
    %v458 = vld [vmem:[#allocation4] sm:$0xff]
    %v459 = vld [vmem:[#allocation4 + $0x8] sm:$0xff]
    %v460 = vld [vmem:[#allocation4 + $0x10] sm:$0xff]
    %v461 = vld [vmem:[#allocation4 + $0x18] sm:$0xff]
    %v462 = vld [vmem:[#allocation4 + $0x20] sm:$0xff]
    %v463 = vld [vmem:[#allocation4 + $0x28] sm:$0xff]
    %v464 = vld [vmem:[#allocation4 + $0x30] sm:$0xff]
    %v465 = vld [vmem:[#allocation4 + $0x38] sm:$0xff]
    %467 = vset.pattern.permute.xlu0 0
    %468 = vperm.xlu0 %467, %v322
    %v469 = vpop.permute.xlu0 %468
    %472 = vset.pattern.permute.xlu0 0
    %473 = vperm.xlu0 %472, %v324
    %v474 = vpop.permute.xlu0 %473
    %477 = vset.pattern.permute.xlu0 0
    %478 = vperm.xlu0 %477, %v326
    %v479 = vpop.permute.xlu0 %478
    %482 = vset.pattern.permute.xlu0 0
    %483 = vperm.xlu0 %482, %v328
    %v484 = vpop.permute.xlu0 %483
    %487 = vset.pattern.permute.xlu0 0
    %488 = vperm.xlu0 %487, %v330
    %v489 = vpop.permute.xlu0 %488
    %492 = vset.pattern.permute.xlu0 0
    %493 = vperm.xlu0 %492, %v332
    %v494 = vpop.permute.xlu0 %493
    %497 = vset.pattern.permute.xlu0 0
    %498 = vperm.xlu0 %497, %v334
    %v499 = vpop.permute.xlu0 %498
    %502 = vset.pattern.permute.xlu0 0
    %503 = vperm.xlu0 %502, %v336
    %v504 = vpop.permute.xlu0 %503
    %v506 = vmul.f32 %v469, %v458
    %v507 = vmul.f32 %v474, %v459
    %v508 = vmul.f32 %v479, %v460
    %v509 = vmul.f32 %v484, %v461
    %v510 = vmul.f32 %v489, %v462
    %v511 = vmul.f32 %v494, %v463
    %v512 = vmul.f32 %v499, %v464
    %v513 = vmul.f32 %v504, %v465
    %v514 = vld [vmem:[%s2] sm:$0xff]
    %v515 = vld [vmem:[%s2 + $0x8] sm:$0xff]
    %v516 = vld [vmem:[%s2 + $0x10] sm:$0xff]
    %v517 = vld [vmem:[%s2 + $0x18] sm:$0xff]
    %v518 = vld [vmem:[%s2 + $0x20] sm:$0xff]
    %v519 = vld [vmem:[%s2 + $0x28] sm:$0xff]
    %v520 = vld [vmem:[%s2 + $0x30] sm:$0xff]
    %v521 = vld [vmem:[%s2 + $0x38] sm:$0xff]
    %v523 = vsel %vm64, %v386, 0
    %525 = vmatpush.msra.mxu0 0.0
    %526 = vmatpush.msra.mxu0 0.0
    %527 = vmatpush.msra.mxu0 0.0
    %528 = vmatpush.msra.mxu0 0.0
    %529 = vmatpush.msra.mxu0 0.0
    %530 = vmatpush.msra.mxu0 0.0
    %531 = vmatpush.msra.mxu0 0.0
    %532 = vmatpush.msra.mxu0 0.0
    %533 = vmatpush.msra.mxu0 0.0
    %534 = vmatpush.msra.mxu0 0.0
    %535 = vmatpush.msra.mxu0 0.0
    %536 = vmatpush.msra.mxu0 0.0
    %537 = vmatpush.msra.mxu0 0.0
    %538 = vmatpush.msra.mxu0 0.0
    %539 = vmatpush.msra.mxu0 0.0
    %540 = vmatpush.msra.mxu0 %v514
    %541 = vmatmul.f32.gmra.mxu0 %v523
    %v542 = vpop.f32.mrf.mxu0
    %v543 = vadd.f32 0.0, %v542
    %544 = vdwg.mxu0
    %v546 = vsel %vm64, %v388, 0
    %548 = vmatpush.msra.mxu0 0.0
    %549 = vmatpush.msra.mxu0 0.0
    %550 = vmatpush.msra.mxu0 0.0
    %551 = vmatpush.msra.mxu0 0.0
    %552 = vmatpush.msra.mxu0 0.0
    %553 = vmatpush.msra.mxu0 0.0
    %554 = vmatpush.msra.mxu0 0.0
    %555 = vmatpush.msra.mxu0 0.0
    %556 = vmatpush.msra.mxu0 0.0
    %557 = vmatpush.msra.mxu0 0.0
    %558 = vmatpush.msra.mxu0 0.0
    %559 = vmatpush.msra.mxu0 0.0
    %560 = vmatpush.msra.mxu0 0.0
    %561 = vmatpush.msra.mxu0 0.0
    %562 = vmatpush.msra.mxu0 0.0
    %563 = vmatpush.msra.mxu0 %v515
    %564 = vmatmul.f32.gmra.mxu0 %v546
    %v565 = vpop.f32.mrf.mxu0
    %v566 = vadd.f32 0.0, %v565
    %567 = vdwg.mxu0
    %v569 = vsel %vm64, %v390, 0
    %571 = vmatpush.msra.mxu0 0.0
    %572 = vmatpush.msra.mxu0 0.0
    %573 = vmatpush.msra.mxu0 0.0
    %574 = vmatpush.msra.mxu0 0.0
    %575 = vmatpush.msra.mxu0 0.0
    %576 = vmatpush.msra.mxu0 0.0
    %577 = vmatpush.msra.mxu0 0.0
    %578 = vmatpush.msra.mxu0 0.0
    %579 = vmatpush.msra.mxu0 0.0
    %580 = vmatpush.msra.mxu0 0.0
    %581 = vmatpush.msra.mxu0 0.0
    %582 = vmatpush.msra.mxu0 0.0
    %583 = vmatpush.msra.mxu0 0.0
    %584 = vmatpush.msra.mxu0 0.0
    %585 = vmatpush.msra.mxu0 0.0
    %586 = vmatpush.msra.mxu0 %v516
    %587 = vmatmul.f32.gmra.mxu0 %v569
    %v588 = vpop.f32.mrf.mxu0
    %v589 = vadd.f32 0.0, %v588
    %590 = vdwg.mxu0
    %v592 = vsel %vm64, %v392, 0
    %594 = vmatpush.msra.mxu0 0.0
    %595 = vmatpush.msra.mxu0 0.0
    %596 = vmatpush.msra.mxu0 0.0
    %597 = vmatpush.msra.mxu0 0.0
    %598 = vmatpush.msra.mxu0 0.0
    %599 = vmatpush.msra.mxu0 0.0
    %600 = vmatpush.msra.mxu0 0.0
    %601 = vmatpush.msra.mxu0 0.0
    %602 = vmatpush.msra.mxu0 0.0
    %603 = vmatpush.msra.mxu0 0.0
    %604 = vmatpush.msra.mxu0 0.0
    %605 = vmatpush.msra.mxu0 0.0
    %606 = vmatpush.msra.mxu0 0.0
    %607 = vmatpush.msra.mxu0 0.0
    %608 = vmatpush.msra.mxu0 0.0
    %609 = vmatpush.msra.mxu0 %v517
    %610 = vmatmul.f32.gmra.mxu0 %v592
    %v611 = vpop.f32.mrf.mxu0
    %v612 = vadd.f32 0.0, %v611
    %613 = vdwg.mxu0
    %v615 = vsel %vm64, %v394, 0
    %617 = vmatpush.msra.mxu0 0.0
    %618 = vmatpush.msra.mxu0 0.0
    %619 = vmatpush.msra.mxu0 0.0
    %620 = vmatpush.msra.mxu0 0.0
    %621 = vmatpush.msra.mxu0 0.0
    %622 = vmatpush.msra.mxu0 0.0
    %623 = vmatpush.msra.mxu0 0.0
    %624 = vmatpush.msra.mxu0 0.0
    %625 = vmatpush.msra.mxu0 0.0
    %626 = vmatpush.msra.mxu0 0.0
    %627 = vmatpush.msra.mxu0 0.0
    %628 = vmatpush.msra.mxu0 0.0
    %629 = vmatpush.msra.mxu0 0.0
    %630 = vmatpush.msra.mxu0 0.0
    %631 = vmatpush.msra.mxu0 0.0
    %632 = vmatpush.msra.mxu0 %v518
    %633 = vmatmul.f32.gmra.mxu0 %v615
    %v634 = vpop.f32.mrf.mxu0
    %v635 = vadd.f32 0.0, %v634
    %636 = vdwg.mxu0
    %v638 = vsel %vm64, %v396, 0
    %640 = vmatpush.msra.mxu0 0.0
    %641 = vmatpush.msra.mxu0 0.0
    %642 = vmatpush.msra.mxu0 0.0
    %643 = vmatpush.msra.mxu0 0.0
    %644 = vmatpush.msra.mxu0 0.0
    %645 = vmatpush.msra.mxu0 0.0
    %646 = vmatpush.msra.mxu0 0.0
    %647 = vmatpush.msra.mxu0 0.0
    %648 = vmatpush.msra.mxu0 0.0
    %649 = vmatpush.msra.mxu0 0.0
    %650 = vmatpush.msra.mxu0 0.0
    %651 = vmatpush.msra.mxu0 0.0
    %652 = vmatpush.msra.mxu0 0.0
    %653 = vmatpush.msra.mxu0 0.0
    %654 = vmatpush.msra.mxu0 0.0
    %655 = vmatpush.msra.mxu0 %v519
    %656 = vmatmul.f32.gmra.mxu0 %v638
    %v657 = vpop.f32.mrf.mxu0
    %v658 = vadd.f32 0.0, %v657
    %659 = vdwg.mxu0
    %v661 = vsel %vm64, %v398, 0
    %663 = vmatpush.msra.mxu0 0.0
    %664 = vmatpush.msra.mxu0 0.0
    %665 = vmatpush.msra.mxu0 0.0
    %666 = vmatpush.msra.mxu0 0.0
    %667 = vmatpush.msra.mxu0 0.0
    %668 = vmatpush.msra.mxu0 0.0
    %669 = vmatpush.msra.mxu0 0.0
    %670 = vmatpush.msra.mxu0 0.0
    %671 = vmatpush.msra.mxu0 0.0
    %672 = vmatpush.msra.mxu0 0.0
    %673 = vmatpush.msra.mxu0 0.0
    %674 = vmatpush.msra.mxu0 0.0
    %675 = vmatpush.msra.mxu0 0.0
    %676 = vmatpush.msra.mxu0 0.0
    %677 = vmatpush.msra.mxu0 0.0
    %678 = vmatpush.msra.mxu0 %v520
    %679 = vmatmul.f32.gmra.mxu0 %v661
    %v680 = vpop.f32.mrf.mxu0
    %v681 = vadd.f32 0.0, %v680
    %682 = vdwg.mxu0
    %v684 = vsel %vm64, %v400, 0
    %686 = vmatpush.msra.mxu0 0.0
    %687 = vmatpush.msra.mxu0 0.0
    %688 = vmatpush.msra.mxu0 0.0
    %689 = vmatpush.msra.mxu0 0.0
    %690 = vmatpush.msra.mxu0 0.0
    %691 = vmatpush.msra.mxu0 0.0
    %692 = vmatpush.msra.mxu0 0.0
    %693 = vmatpush.msra.mxu0 0.0
    %694 = vmatpush.msra.mxu0 0.0
    %695 = vmatpush.msra.mxu0 0.0
    %696 = vmatpush.msra.mxu0 0.0
    %697 = vmatpush.msra.mxu0 0.0
    %698 = vmatpush.msra.mxu0 0.0
    %699 = vmatpush.msra.mxu0 0.0
    %700 = vmatpush.msra.mxu0 0.0
    %701 = vmatpush.msra.mxu0 %v521
    %702 = vmatmul.f32.gmra.mxu0 %v684
    %v703 = vpop.f32.mrf.mxu0
    %v704 = vadd.f32 0.0, %v703
    %705 = vdwg.mxu0
    %v706 = vadd.f32 %v506, %v543
    %v707 = vadd.f32 %v507, %v566
    %v708 = vadd.f32 %v508, %v589
    %v709 = vadd.f32 %v509, %v612
    %v710 = vadd.f32 %v510, %v635
    %v711 = vadd.f32 %v511, %v658
    %v712 = vadd.f32 %v512, %v681
    %v713 = vadd.f32 %v513, %v704
    %714 = vst.msk [vmem:[#allocation4] sm:$0xff] %vm64, %v706
    %715 = vst.msk [vmem:[#allocation4 + $0x8] sm:$0xff] %vm64, %v707
    %716 = vst.msk [vmem:[#allocation4 + $0x10] sm:$0xff] %vm64, %v708
    %717 = vst.msk [vmem:[#allocation4 + $0x18] sm:$0xff] %vm64, %v709
    %718 = vst.msk [vmem:[#allocation4 + $0x20] sm:$0xff] %vm64, %v710
    %719 = vst.msk [vmem:[#allocation4 + $0x28] sm:$0xff] %vm64, %v711
    %720 = vst.msk [vmem:[#allocation4 + $0x30] sm:$0xff] %vm64, %v712
    %721 = vst.msk [vmem:[#allocation4 + $0x38] sm:$0xff] %vm64, %v713
    %722 = vst.msk [vmem:[#allocation2] sm:$0xff] %vm449, %v305
    %723 = vst.msk [vmem:[#allocation2 + $0x8] sm:$0xff] %vm449, %v306
    %724 = vst.msk [vmem:[#allocation2 + $0x10] sm:$0xff] %vm449, %v307
    %725 = vst.msk [vmem:[#allocation2 + $0x18] sm:$0xff] %vm449, %v308
    %726 = vst.msk [vmem:[#allocation2 + $0x20] sm:$0xff] %vm449, %v309
    %727 = vst.msk [vmem:[#allocation2 + $0x28] sm:$0xff] %vm449, %v310
    %728 = vst.msk [vmem:[#allocation2 + $0x30] sm:$0xff] %vm449, %v311
    %729 = vst.msk [vmem:[#allocation2 + $0x38] sm:$0xff] %vm449, %v312
  $region21: #{block_forward.6} parent=0 // pred_fallthru
    _
  %p730 = scmp.eq.s32.totalorder 0, 0
  // Predicated region
  $region22: #{block_forward.6} parent=0 // pred_check
    %p731 = pneg %p730
  $region23: #{block_forward.6} parent=0 // pred_check_branch
    %733 = sbr.rel (%p731) target = $region25
  $region24: #{block_forward.6} parent=0 // pred_region
    %v734 = vld [vmem:[%s0] sm:$0xff]
    %v735 = vld [vmem:[%s0 + $0x8] sm:$0xff]
    %v736 = vld [vmem:[%s0 + $0x10] sm:$0xff]
    %v737 = vld [vmem:[%s0 + $0x18] sm:$0xff]
    %v738 = vld [vmem:[%s0 + $0x20] sm:$0xff]
    %v739 = vld [vmem:[%s0 + $0x28] sm:$0xff]
    %v740 = vld [vmem:[%s0 + $0x30] sm:$0xff]
    %v741 = vld [vmem:[%s0 + $0x38] sm:$0xff]
    %v742 = vld [vmem:[%s1] sm:$0xff]
    %v743 = vld [vmem:[%s1 + $0x8] sm:$0xff]
    %v744 = vld [vmem:[%s1 + $0x10] sm:$0xff]
    %v745 = vld [vmem:[%s1 + $0x18] sm:$0xff]
    %v746 = vld [vmem:[%s1 + $0x20] sm:$0xff]
    %v747 = vld [vmem:[%s1 + $0x28] sm:$0xff]
    %v748 = vld [vmem:[%s1 + $0x30] sm:$0xff]
    %v749 = vld [vmem:[%s1 + $0x38] sm:$0xff]
    %vm750 = vcmask 64512
    %v752 = vsel %vm750, %v734, 0
    %v755 = vsel %vm750, %v742, 0
    %757 = vmatpush.xpose.msra.mxu0 0.0
    %758 = vmatpush.xpose.msra.mxu0 0.0
    %759 = vmatpush.xpose.msra.mxu0 0.0
    %760 = vmatpush.xpose.msra.mxu0 0.0
    %761 = vmatpush.xpose.msra.mxu0 0.0
    %762 = vmatpush.xpose.msra.mxu0 0.0
    %763 = vmatpush.xpose.msra.mxu0 0.0
    %764 = vmatpush.xpose.msra.mxu0 0.0
    %765 = vmatpush.xpose.msra.mxu0 0.0
    %766 = vmatpush.xpose.msra.mxu0 0.0
    %767 = vmatpush.xpose.msra.mxu0 0.0
    %768 = vmatpush.xpose.msra.mxu0 0.0
    %769 = vmatpush.xpose.msra.mxu0 0.0
    %770 = vmatpush.xpose.msra.mxu0 0.0
    %771 = vmatpush.xpose.msra.mxu0 0.0
    %772 = vmatpush.xpose.msra.mxu0 %v755
    %773 = vmatmul.f32.gmra.mxu0 %v752
    %v774 = vpop.f32.mrf.mxu0
    %v775 = vadd.f32 0.0, %v774
    %776 = vdwg.mxu0
    %v778 = vsel %vm750, %v735, 0
    %v781 = vsel %vm750, %v743, 0
    %783 = vmatpush.xpose.msra.mxu0 0.0
    %784 = vmatpush.xpose.msra.mxu0 0.0
    %785 = vmatpush.xpose.msra.mxu0 0.0
    %786 = vmatpush.xpose.msra.mxu0 0.0
    %787 = vmatpush.xpose.msra.mxu0 0.0
    %788 = vmatpush.xpose.msra.mxu0 0.0
    %789 = vmatpush.xpose.msra.mxu0 0.0
    %790 = vmatpush.xpose.msra.mxu0 0.0
    %791 = vmatpush.xpose.msra.mxu0 0.0
    %792 = vmatpush.xpose.msra.mxu0 0.0
    %793 = vmatpush.xpose.msra.mxu0 0.0
    %794 = vmatpush.xpose.msra.mxu0 0.0
    %795 = vmatpush.xpose.msra.mxu0 0.0
    %796 = vmatpush.xpose.msra.mxu0 0.0
    %797 = vmatpush.xpose.msra.mxu0 0.0
    %798 = vmatpush.xpose.msra.mxu0 %v781
    %799 = vmatmul.f32.gmra.mxu0 %v778
    %v800 = vpop.f32.mrf.mxu0
    %v801 = vadd.f32 0.0, %v800
    %802 = vdwg.mxu0
    %v804 = vsel %vm750, %v736, 0
    %v807 = vsel %vm750, %v744, 0
    %809 = vmatpush.xpose.msra.mxu0 0.0
    %810 = vmatpush.xpose.msra.mxu0 0.0
    %811 = vmatpush.xpose.msra.mxu0 0.0
    %812 = vmatpush.xpose.msra.mxu0 0.0
    %813 = vmatpush.xpose.msra.mxu0 0.0
    %814 = vmatpush.xpose.msra.mxu0 0.0
    %815 = vmatpush.xpose.msra.mxu0 0.0
    %816 = vmatpush.xpose.msra.mxu0 0.0
    %817 = vmatpush.xpose.msra.mxu0 0.0
    %818 = vmatpush.xpose.msra.mxu0 0.0
    %819 = vmatpush.xpose.msra.mxu0 0.0
    %820 = vmatpush.xpose.msra.mxu0 0.0
    %821 = vmatpush.xpose.msra.mxu0 0.0
    %822 = vmatpush.xpose.msra.mxu0 0.0
    %823 = vmatpush.xpose.msra.mxu0 0.0
    %824 = vmatpush.xpose.msra.mxu0 %v807
    %825 = vmatmul.f32.gmra.mxu0 %v804
    %v826 = vpop.f32.mrf.mxu0
    %v827 = vadd.f32 0.0, %v826
    %828 = vdwg.mxu0
    %v830 = vsel %vm750, %v737, 0
    %v833 = vsel %vm750, %v745, 0
    %835 = vmatpush.xpose.msra.mxu0 0.0
    %836 = vmatpush.xpose.msra.mxu0 0.0
    %837 = vmatpush.xpose.msra.mxu0 0.0
    %838 = vmatpush.xpose.msra.mxu0 0.0
    %839 = vmatpush.xpose.msra.mxu0 0.0
    %840 = vmatpush.xpose.msra.mxu0 0.0
    %841 = vmatpush.xpose.msra.mxu0 0.0
    %842 = vmatpush.xpose.msra.mxu0 0.0
    %843 = vmatpush.xpose.msra.mxu0 0.0
    %844 = vmatpush.xpose.msra.mxu0 0.0
    %845 = vmatpush.xpose.msra.mxu0 0.0
    %846 = vmatpush.xpose.msra.mxu0 0.0
    %847 = vmatpush.xpose.msra.mxu0 0.0
    %848 = vmatpush.xpose.msra.mxu0 0.0
    %849 = vmatpush.xpose.msra.mxu0 0.0
    %850 = vmatpush.xpose.msra.mxu0 %v833
    %851 = vmatmul.f32.gmra.mxu0 %v830
    %v852 = vpop.f32.mrf.mxu0
    %v853 = vadd.f32 0.0, %v852
    %854 = vdwg.mxu0
    %v856 = vsel %vm750, %v738, 0
    %v859 = vsel %vm750, %v746, 0
    %861 = vmatpush.xpose.msra.mxu0 0.0
    %862 = vmatpush.xpose.msra.mxu0 0.0
    %863 = vmatpush.xpose.msra.mxu0 0.0
    %864 = vmatpush.xpose.msra.mxu0 0.0
    %865 = vmatpush.xpose.msra.mxu0 0.0
    %866 = vmatpush.xpose.msra.mxu0 0.0
    %867 = vmatpush.xpose.msra.mxu0 0.0
    %868 = vmatpush.xpose.msra.mxu0 0.0
    %869 = vmatpush.xpose.msra.mxu0 0.0
    %870 = vmatpush.xpose.msra.mxu0 0.0
    %871 = vmatpush.xpose.msra.mxu0 0.0
    %872 = vmatpush.xpose.msra.mxu0 0.0
    %873 = vmatpush.xpose.msra.mxu0 0.0
    %874 = vmatpush.xpose.msra.mxu0 0.0
    %875 = vmatpush.xpose.msra.mxu0 0.0
    %876 = vmatpush.xpose.msra.mxu0 %v859
    %877 = vmatmul.f32.gmra.mxu0 %v856
    %v878 = vpop.f32.mrf.mxu0
    %v879 = vadd.f32 0.0, %v878
    %880 = vdwg.mxu0
    %v882 = vsel %vm750, %v739, 0
    %v885 = vsel %vm750, %v747, 0
    %887 = vmatpush.xpose.msra.mxu0 0.0
    %888 = vmatpush.xpose.msra.mxu0 0.0
    %889 = vmatpush.xpose.msra.mxu0 0.0
    %890 = vmatpush.xpose.msra.mxu0 0.0
    %891 = vmatpush.xpose.msra.mxu0 0.0
    %892 = vmatpush.xpose.msra.mxu0 0.0
    %893 = vmatpush.xpose.msra.mxu0 0.0
    %894 = vmatpush.xpose.msra.mxu0 0.0
    %895 = vmatpush.xpose.msra.mxu0 0.0
    %896 = vmatpush.xpose.msra.mxu0 0.0
    %897 = vmatpush.xpose.msra.mxu0 0.0
    %898 = vmatpush.xpose.msra.mxu0 0.0
    %899 = vmatpush.xpose.msra.mxu0 0.0
    %900 = vmatpush.xpose.msra.mxu0 0.0
    %901 = vmatpush.xpose.msra.mxu0 0.0
    %902 = vmatpush.xpose.msra.mxu0 %v885
    %903 = vmatmul.f32.gmra.mxu0 %v882
    %v904 = vpop.f32.mrf.mxu0
    %v905 = vadd.f32 0.0, %v904
    %906 = vdwg.mxu0
    %v908 = vsel %vm750, %v740, 0
    %v911 = vsel %vm750, %v748, 0
    %913 = vmatpush.xpose.msra.mxu0 0.0
    %914 = vmatpush.xpose.msra.mxu0 0.0
    %915 = vmatpush.xpose.msra.mxu0 0.0
    %916 = vmatpush.xpose.msra.mxu0 0.0
    %917 = vmatpush.xpose.msra.mxu0 0.0
    %918 = vmatpush.xpose.msra.mxu0 0.0
    %919 = vmatpush.xpose.msra.mxu0 0.0
    %920 = vmatpush.xpose.msra.mxu0 0.0
    %921 = vmatpush.xpose.msra.mxu0 0.0
    %922 = vmatpush.xpose.msra.mxu0 0.0
    %923 = vmatpush.xpose.msra.mxu0 0.0
    %924 = vmatpush.xpose.msra.mxu0 0.0
    %925 = vmatpush.xpose.msra.mxu0 0.0
    %926 = vmatpush.xpose.msra.mxu0 0.0
    %927 = vmatpush.xpose.msra.mxu0 0.0
    %928 = vmatpush.xpose.msra.mxu0 %v911
    %929 = vmatmul.f32.gmra.mxu0 %v908
    %v930 = vpop.f32.mrf.mxu0
    %v931 = vadd.f32 0.0, %v930
    %932 = vdwg.mxu0
    %v934 = vsel %vm750, %v741, 0
    %v937 = vsel %vm750, %v749, 0
    %939 = vmatpush.xpose.msra.mxu0 0.0
    %940 = vmatpush.xpose.msra.mxu0 0.0
    %941 = vmatpush.xpose.msra.mxu0 0.0
    %942 = vmatpush.xpose.msra.mxu0 0.0
    %943 = vmatpush.xpose.msra.mxu0 0.0
    %944 = vmatpush.xpose.msra.mxu0 0.0
    %945 = vmatpush.xpose.msra.mxu0 0.0
    %946 = vmatpush.xpose.msra.mxu0 0.0
    %947 = vmatpush.xpose.msra.mxu0 0.0
    %948 = vmatpush.xpose.msra.mxu0 0.0
    %949 = vmatpush.xpose.msra.mxu0 0.0
    %950 = vmatpush.xpose.msra.mxu0 0.0
    %951 = vmatpush.xpose.msra.mxu0 0.0
    %952 = vmatpush.xpose.msra.mxu0 0.0
    %953 = vmatpush.xpose.msra.mxu0 0.0
    %954 = vmatpush.xpose.msra.mxu0 %v937
    %955 = vmatmul.f32.gmra.mxu0 %v934
    %v956 = vpop.f32.mrf.mxu0
    %v957 = vadd.f32 0.0, %v956
    %958 = vdwg.mxu0
    %s959 = smul.u32 0, 8
    %v960 = vlaneseq
    %v961 = vshrl.u32 %v960, 7
    %v962 = vstv %s959
    %v963 = vadd.s32 %v962, %v961
    %s964 = smul.u32 0, 8
    %v965 = vlaneseq
    %v966 = vand.u32 %v965, 127
    %v967 = vstv %s964
    %v968 = vadd.s32 %v967, %v966
    %vm969 = vcmp.le.s32.totalorder %v968, %v963
    %v970 = vsel %vm969, 1, 0
    %vm971 = vcmp.eq.s32.totalorder %v970, 1
    %v972 = vsel %vm971, %v775, -1e+30
    %v973 = vsel %vm971, %v801, -1e+30
    %v974 = vsel %vm971, %v827, -1e+30
    %v975 = vsel %vm971, %v853, -1e+30
    %v976 = vsel %vm971, %v879, -1e+30
    %v977 = vsel %vm971, %v905, -1e+30
    %v978 = vsel %vm971, %v931, -1e+30
    %v979 = vsel %vm971, %v957, -1e+30
    %v980 = vld [vmem:[#allocation2] sm:$0xff]
    %v981 = vld [vmem:[#allocation2 + $0x8] sm:$0xff]
    %v982 = vld [vmem:[#allocation2 + $0x10] sm:$0xff]
    %v983 = vld [vmem:[#allocation2 + $0x18] sm:$0xff]
    %v984 = vld [vmem:[#allocation2 + $0x20] sm:$0xff]
    %v985 = vld [vmem:[#allocation2 + $0x28] sm:$0xff]
    %v986 = vld [vmem:[#allocation2 + $0x30] sm:$0xff]
    %v987 = vld [vmem:[#allocation2 + $0x38] sm:$0xff]
    %v988 = vsel %vm750, %v972, -inf
    %989 = vmax.xlane.f32.xlu0 %v988
    %v990 = vpop.xlane.xlu0 %989
    %v991 = vsel %vm750, %v973, -inf
    %992 = vmax.xlane.f32.xlu0 %v991
    %v993 = vpop.xlane.xlu0 %992
    %v994 = vsel %vm750, %v974, -inf
    %995 = vmax.xlane.f32.xlu0 %v994
    %v996 = vpop.xlane.xlu0 %995
    %v997 = vsel %vm750, %v975, -inf
    %998 = vmax.xlane.f32.xlu0 %v997
    %v999 = vpop.xlane.xlu0 %998
    %v1000 = vsel %vm750, %v976, -inf
    %1001 = vmax.xlane.f32.xlu0 %v1000
    %v1002 = vpop.xlane.xlu0 %1001
    %v1003 = vsel %vm750, %v977, -inf
    %1004 = vmax.xlane.f32.xlu0 %v1003
    %v1005 = vpop.xlane.xlu0 %1004
    %v1006 = vsel %vm750, %v978, -inf
    %1007 = vmax.xlane.f32.xlu0 %v1006
    %v1008 = vpop.xlane.xlu0 %1007
    %v1009 = vsel %vm750, %v979, -inf
    %1010 = vmax.xlane.f32.xlu0 %v1009
    %v1011 = vpop.xlane.xlu0 %1010
    %v1012 = vmax.f32 %v980, %v990
    %v1013 = vmax.f32 %v981, %v993
    %v1014 = vmax.f32 %v982, %v996
    %v1015 = vmax.f32 %v983, %v999
    %v1016 = vmax.f32 %v984, %v1002
    %v1017 = vmax.f32 %v985, %v1005
    %v1018 = vmax.f32 %v986, %v1008
    %v1019 = vmax.f32 %v987, %v1011
    %v1020 = vsub.f32 %v980, %v1012
    %v1021 = vsub.f32 %v981, %v1013
    %v1022 = vsub.f32 %v982, %v1014
    %v1023 = vsub.f32 %v983, %v1015
    %v1024 = vsub.f32 %v984, %v1016
    %v1025 = vsub.f32 %v985, %v1017
    %v1026 = vsub.f32 %v986, %v1018
    %v1027 = vsub.f32 %v987, %v1019
    %v1028 = vmul.f32 %v1020, 1.442695
    %v1029 = vpow.pop %v1028
    %v1030 = vmul.f32 %v1021, 1.442695
    %v1031 = vpow.pop %v1030
    %v1032 = vmul.f32 %v1022, 1.442695
    %v1033 = vpow.pop %v1032
    %v1034 = vmul.f32 %v1023, 1.442695
    %v1035 = vpow.pop %v1034
    %v1036 = vmul.f32 %v1024, 1.442695
    %v1037 = vpow.pop %v1036
    %v1038 = vmul.f32 %v1025, 1.442695
    %v1039 = vpow.pop %v1038
    %v1040 = vmul.f32 %v1026, 1.442695
    %v1041 = vpow.pop %v1040
    %v1042 = vmul.f32 %v1027, 1.442695
    %v1043 = vpow.pop %v1042
    %1045 = vset.pattern.permute.xlu0 0
    %1046 = vperm.xlu0 %1045, %v1012
    %v1047 = vpop.permute.xlu0 %1046
    %1050 = vset.pattern.permute.xlu0 0
    %1051 = vperm.xlu0 %1050, %v1013
    %v1052 = vpop.permute.xlu0 %1051
    %1055 = vset.pattern.permute.xlu0 0
    %1056 = vperm.xlu0 %1055, %v1014
    %v1057 = vpop.permute.xlu0 %1056
    %1060 = vset.pattern.permute.xlu0 0
    %1061 = vperm.xlu0 %1060, %v1015
    %v1062 = vpop.permute.xlu0 %1061
    %1065 = vset.pattern.permute.xlu0 0
    %1066 = vperm.xlu0 %1065, %v1016
    %v1067 = vpop.permute.xlu0 %1066
    %1070 = vset.pattern.permute.xlu0 0
    %1071 = vperm.xlu0 %1070, %v1017
    %v1072 = vpop.permute.xlu0 %1071
    %1075 = vset.pattern.permute.xlu0 0
    %1076 = vperm.xlu0 %1075, %v1018
    %v1077 = vpop.permute.xlu0 %1076
    %1080 = vset.pattern.permute.xlu0 0
    %1081 = vperm.xlu0 %1080, %v1019
    %v1082 = vpop.permute.xlu0 %1081
    %v1084 = vsub.f32 %v972, %v1047
    %v1085 = vsub.f32 %v973, %v1052
    %v1086 = vsub.f32 %v974, %v1057
    %v1087 = vsub.f32 %v975, %v1062
    %v1088 = vsub.f32 %v976, %v1067
    %v1089 = vsub.f32 %v977, %v1072
    %v1090 = vsub.f32 %v978, %v1077
    %v1091 = vsub.f32 %v979, %v1082
    %v1092 = vmul.f32 %v1084, 1.442695
    %v1093 = vpow.pop %v1092
    %v1094 = vmul.f32 %v1085, 1.442695
    %v1095 = vpow.pop %v1094
    %v1096 = vmul.f32 %v1086, 1.442695
    %v1097 = vpow.pop %v1096
    %v1098 = vmul.f32 %v1087, 1.442695
    %v1099 = vpow.pop %v1098
    %v1100 = vmul.f32 %v1088, 1.442695
    %v1101 = vpow.pop %v1100
    %v1102 = vmul.f32 %v1089, 1.442695
    %v1103 = vpow.pop %v1102
    %v1104 = vmul.f32 %v1090, 1.442695
    %v1105 = vpow.pop %v1104
    %v1106 = vmul.f32 %v1091, 1.442695
    %v1107 = vpow.pop %v1106
    %v1108 = vld [vmem:[#allocation3] sm:$0xff]
    %v1109 = vld [vmem:[#allocation3 + $0x8] sm:$0xff]
    %v1110 = vld [vmem:[#allocation3 + $0x10] sm:$0xff]
    %v1111 = vld [vmem:[#allocation3 + $0x18] sm:$0xff]
    %v1112 = vld [vmem:[#allocation3 + $0x20] sm:$0xff]
    %v1113 = vld [vmem:[#allocation3 + $0x28] sm:$0xff]
    %v1114 = vld [vmem:[#allocation3 + $0x30] sm:$0xff]
    %v1115 = vld [vmem:[#allocation3 + $0x38] sm:$0xff]
    %v1116 = vmul.f32 %v1029, %v1108
    %v1117 = vmul.f32 %v1031, %v1109
    %v1118 = vmul.f32 %v1033, %v1110
    %v1119 = vmul.f32 %v1035, %v1111
    %v1120 = vmul.f32 %v1037, %v1112
    %v1121 = vmul.f32 %v1039, %v1113
    %v1122 = vmul.f32 %v1041, %v1114
    %v1123 = vmul.f32 %v1043, %v1115
    %v1124 = vsel %vm750, %v1093, 0.0
    %1125 = vadd.xlane.f32.xlu0 %v1124
    %v1126 = vpop.xlane.xlu0 %1125
    %v1127 = vsel %vm750, %v1095, 0.0
    %1128 = vadd.xlane.f32.xlu0 %v1127
    %v1129 = vpop.xlane.xlu0 %1128
    %v1130 = vsel %vm750, %v1097, 0.0
    %1131 = vadd.xlane.f32.xlu0 %v1130
    %v1132 = vpop.xlane.xlu0 %1131
    %v1133 = vsel %vm750, %v1099, 0.0
    %1134 = vadd.xlane.f32.xlu0 %v1133
    %v1135 = vpop.xlane.xlu0 %1134
    %v1136 = vsel %vm750, %v1101, 0.0
    %1137 = vadd.xlane.f32.xlu0 %v1136
    %v1138 = vpop.xlane.xlu0 %1137
    %v1139 = vsel %vm750, %v1103, 0.0
    %1140 = vadd.xlane.f32.xlu0 %v1139
    %v1141 = vpop.xlane.xlu0 %1140
    %v1142 = vsel %vm750, %v1105, 0.0
    %1143 = vadd.xlane.f32.xlu0 %v1142
    %v1144 = vpop.xlane.xlu0 %1143
    %v1145 = vsel %vm750, %v1107, 0.0
    %1146 = vadd.xlane.f32.xlu0 %v1145
    %v1147 = vpop.xlane.xlu0 %1146
    %v1148 = vadd.f32 %v1116, %v1126
    %v1149 = vadd.f32 %v1117, %v1129
    %v1150 = vadd.f32 %v1118, %v1132
    %v1151 = vadd.f32 %v1119, %v1135
    %v1152 = vadd.f32 %v1120, %v1138
    %v1153 = vadd.f32 %v1121, %v1141
    %v1154 = vadd.f32 %v1122, %v1144
    %v1155 = vadd.f32 %v1123, %v1147
    %vm1156 = vcmask 7168
    %1157 = vst.msk [vmem:[#allocation3] sm:$0xff] %vm1156, %v1148
    %1158 = vst.msk [vmem:[#allocation3 + $0x8] sm:$0xff] %vm1156, %v1149
    %1159 = vst.msk [vmem:[#allocation3 + $0x10] sm:$0xff] %vm1156, %v1150
    %1160 = vst.msk [vmem:[#allocation3 + $0x18] sm:$0xff] %vm1156, %v1151
    %1161 = vst.msk [vmem:[#allocation3 + $0x20] sm:$0xff] %vm1156, %v1152
    %1162 = vst.msk [vmem:[#allocation3 + $0x28] sm:$0xff] %vm1156, %v1153
    %1163 = vst.msk [vmem:[#allocation3 + $0x30] sm:$0xff] %vm1156, %v1154
    %1164 = vst.msk [vmem:[#allocation3 + $0x38] sm:$0xff] %vm1156, %v1155
    %v1165 = vld [vmem:[#allocation4] sm:$0xff]
    %v1166 = vld [vmem:[#allocation4 + $0x8] sm:$0xff]
    %v1167 = vld [vmem:[#allocation4 + $0x10] sm:$0xff]
    %v1168 = vld [vmem:[#allocation4 + $0x18] sm:$0xff]
    %v1169 = vld [vmem:[#allocation4 + $0x20] sm:$0xff]
    %v1170 = vld [vmem:[#allocation4 + $0x28] sm:$0xff]
    %v1171 = vld [vmem:[#allocation4 + $0x30] sm:$0xff]
    %v1172 = vld [vmem:[#allocation4 + $0x38] sm:$0xff]
    %1174 = vset.pattern.permute.xlu0 0
    %1175 = vperm.xlu0 %1174, %v1029
    %v1176 = vpop.permute.xlu0 %1175
    %1179 = vset.pattern.permute.xlu0 0
    %1180 = vperm.xlu0 %1179, %v1031
    %v1181 = vpop.permute.xlu0 %1180
    %1184 = vset.pattern.permute.xlu0 0
    %1185 = vperm.xlu0 %1184, %v1033
    %v1186 = vpop.permute.xlu0 %1185
    %1189 = vset.pattern.permute.xlu0 0
    %1190 = vperm.xlu0 %1189, %v1035
    %v1191 = vpop.permute.xlu0 %1190
    %1194 = vset.pattern.permute.xlu0 0
    %1195 = vperm.xlu0 %1194, %v1037
    %v1196 = vpop.permute.xlu0 %1195
    %1199 = vset.pattern.permute.xlu0 0
    %1200 = vperm.xlu0 %1199, %v1039
    %v1201 = vpop.permute.xlu0 %1200
    %1204 = vset.pattern.permute.xlu0 0
    %1205 = vperm.xlu0 %1204, %v1041
    %v1206 = vpop.permute.xlu0 %1205
    %1209 = vset.pattern.permute.xlu0 0
    %1210 = vperm.xlu0 %1209, %v1043
    %v1211 = vpop.permute.xlu0 %1210
    %v1213 = vmul.f32 %v1176, %v1165
    %v1214 = vmul.f32 %v1181, %v1166
    %v1215 = vmul.f32 %v1186, %v1167
    %v1216 = vmul.f32 %v1191, %v1168
    %v1217 = vmul.f32 %v1196, %v1169
    %v1218 = vmul.f32 %v1201, %v1170
    %v1219 = vmul.f32 %v1206, %v1171
    %v1220 = vmul.f32 %v1211, %v1172
    %v1221 = vld [vmem:[%s2] sm:$0xff]
    %v1222 = vld [vmem:[%s2 + $0x8] sm:$0xff]
    %v1223 = vld [vmem:[%s2 + $0x10] sm:$0xff]
    %v1224 = vld [vmem:[%s2 + $0x18] sm:$0xff]
    %v1225 = vld [vmem:[%s2 + $0x20] sm:$0xff]
    %v1226 = vld [vmem:[%s2 + $0x28] sm:$0xff]
    %v1227 = vld [vmem:[%s2 + $0x30] sm:$0xff]
    %v1228 = vld [vmem:[%s2 + $0x38] sm:$0xff]
    %v1230 = vsel %vm750, %v1093, 0
    %1232 = vmatpush.msra.mxu0 0.0
    %1233 = vmatpush.msra.mxu0 0.0
    %1234 = vmatpush.msra.mxu0 0.0
    %1235 = vmatpush.msra.mxu0 0.0
    %1236 = vmatpush.msra.mxu0 0.0
    %1237 = vmatpush.msra.mxu0 0.0
    %1238 = vmatpush.msra.mxu0 0.0
    %1239 = vmatpush.msra.mxu0 0.0
    %1240 = vmatpush.msra.mxu0 0.0
    %1241 = vmatpush.msra.mxu0 0.0
    %1242 = vmatpush.msra.mxu0 0.0
    %1243 = vmatpush.msra.mxu0 0.0
    %1244 = vmatpush.msra.mxu0 0.0
    %1245 = vmatpush.msra.mxu0 0.0
    %1246 = vmatpush.msra.mxu0 0.0
    %1247 = vmatpush.msra.mxu0 %v1221
    %1248 = vmatmul.f32.gmra.mxu0 %v1230
    %v1249 = vpop.f32.mrf.mxu0
    %v1250 = vadd.f32 0.0, %v1249
    %1251 = vdwg.mxu0
    %v1253 = vsel %vm750, %v1095, 0
    %1255 = vmatpush.msra.mxu0 0.0
    %1256 = vmatpush.msra.mxu0 0.0
    %1257 = vmatpush.msra.mxu0 0.0
    %1258 = vmatpush.msra.mxu0 0.0
    %1259 = vmatpush.msra.mxu0 0.0
    %1260 = vmatpush.msra.mxu0 0.0
    %1261 = vmatpush.msra.mxu0 0.0
    %1262 = vmatpush.msra.mxu0 0.0
    %1263 = vmatpush.msra.mxu0 0.0
    %1264 = vmatpush.msra.mxu0 0.0
    %1265 = vmatpush.msra.mxu0 0.0
    %1266 = vmatpush.msra.mxu0 0.0
    %1267 = vmatpush.msra.mxu0 0.0
    %1268 = vmatpush.msra.mxu0 0.0
    %1269 = vmatpush.msra.mxu0 0.0
    %1270 = vmatpush.msra.mxu0 %v1222
    %1271 = vmatmul.f32.gmra.mxu0 %v1253
    %v1272 = vpop.f32.mrf.mxu0
    %v1273 = vadd.f32 0.0, %v1272
    %1274 = vdwg.mxu0
    %v1276 = vsel %vm750, %v1097, 0
    %1278 = vmatpush.msra.mxu0 0.0
    %1279 = vmatpush.msra.mxu0 0.0
    %1280 = vmatpush.msra.mxu0 0.0
    %1281 = vmatpush.msra.mxu0 0.0
    %1282 = vmatpush.msra.mxu0 0.0
    %1283 = vmatpush.msra.mxu0 0.0
    %1284 = vmatpush.msra.mxu0 0.0
    %1285 = vmatpush.msra.mxu0 0.0
    %1286 = vmatpush.msra.mxu0 0.0
    %1287 = vmatpush.msra.mxu0 0.0
    %1288 = vmatpush.msra.mxu0 0.0
    %1289 = vmatpush.msra.mxu0 0.0
    %1290 = vmatpush.msra.mxu0 0.0
    %1291 = vmatpush.msra.mxu0 0.0
    %1292 = vmatpush.msra.mxu0 0.0
    %1293 = vmatpush.msra.mxu0 %v1223
    %1294 = vmatmul.f32.gmra.mxu0 %v1276
    %v1295 = vpop.f32.mrf.mxu0
    %v1296 = vadd.f32 0.0, %v1295
    %1297 = vdwg.mxu0
    %v1299 = vsel %vm750, %v1099, 0
    %1301 = vmatpush.msra.mxu0 0.0
    %1302 = vmatpush.msra.mxu0 0.0
    %1303 = vmatpush.msra.mxu0 0.0
    %1304 = vmatpush.msra.mxu0 0.0
    %1305 = vmatpush.msra.mxu0 0.0
    %1306 = vmatpush.msra.mxu0 0.0
    %1307 = vmatpush.msra.mxu0 0.0
    %1308 = vmatpush.msra.mxu0 0.0
    %1309 = vmatpush.msra.mxu0 0.0
    %1310 = vmatpush.msra.mxu0 0.0
    %1311 = vmatpush.msra.mxu0 0.0
    %1312 = vmatpush.msra.mxu0 0.0
    %1313 = vmatpush.msra.mxu0 0.0
    %1314 = vmatpush.msra.mxu0 0.0
    %1315 = vmatpush.msra.mxu0 0.0
    %1316 = vmatpush.msra.mxu0 %v1224
    %1317 = vmatmul.f32.gmra.mxu0 %v1299
    %v1318 = vpop.f32.mrf.mxu0
    %v1319 = vadd.f32 0.0, %v1318
    %1320 = vdwg.mxu0
    %v1322 = vsel %vm750, %v1101, 0
    %1324 = vmatpush.msra.mxu0 0.0
    %1325 = vmatpush.msra.mxu0 0.0
    %1326 = vmatpush.msra.mxu0 0.0
    %1327 = vmatpush.msra.mxu0 0.0
    %1328 = vmatpush.msra.mxu0 0.0
    %1329 = vmatpush.msra.mxu0 0.0
    %1330 = vmatpush.msra.mxu0 0.0
    %1331 = vmatpush.msra.mxu0 0.0
    %1332 = vmatpush.msra.mxu0 0.0
    %1333 = vmatpush.msra.mxu0 0.0
    %1334 = vmatpush.msra.mxu0 0.0
    %1335 = vmatpush.msra.mxu0 0.0
    %1336 = vmatpush.msra.mxu0 0.0
    %1337 = vmatpush.msra.mxu0 0.0
    %1338 = vmatpush.msra.mxu0 0.0
    %1339 = vmatpush.msra.mxu0 %v1225
    %1340 = vmatmul.f32.gmra.mxu0 %v1322
    %v1341 = vpop.f32.mrf.mxu0
    %v1342 = vadd.f32 0.0, %v1341
    %1343 = vdwg.mxu0
    %v1345 = vsel %vm750, %v1103, 0
    %1347 = vmatpush.msra.mxu0 0.0
    %1348 = vmatpush.msra.mxu0 0.0
    %1349 = vmatpush.msra.mxu0 0.0
    %1350 = vmatpush.msra.mxu0 0.0
    %1351 = vmatpush.msra.mxu0 0.0
    %1352 = vmatpush.msra.mxu0 0.0
    %1353 = vmatpush.msra.mxu0 0.0
    %1354 = vmatpush.msra.mxu0 0.0
    %1355 = vmatpush.msra.mxu0 0.0
    %1356 = vmatpush.msra.mxu0 0.0
    %1357 = vmatpush.msra.mxu0 0.0
    %1358 = vmatpush.msra.mxu0 0.0
    %1359 = vmatpush.msra.mxu0 0.0
    %1360 = vmatpush.msra.mxu0 0.0
    %1361 = vmatpush.msra.mxu0 0.0
    %1362 = vmatpush.msra.mxu0 %v1226
    %1363 = vmatmul.f32.gmra.mxu0 %v1345
    %v1364 = vpop.f32.mrf.mxu0
    %v1365 = vadd.f32 0.0, %v1364
    %1366 = vdwg.mxu0
    %v1368 = vsel %vm750, %v1105, 0
    %1370 = vmatpush.msra.mxu0 0.0
    %1371 = vmatpush.msra.mxu0 0.0
    %1372 = vmatpush.msra.mxu0 0.0
    %1373 = vmatpush.msra.mxu0 0.0
    %1374 = vmatpush.msra.mxu0 0.0
    %1375 = vmatpush.msra.mxu0 0.0
    %1376 = vmatpush.msra.mxu0 0.0
    %1377 = vmatpush.msra.mxu0 0.0
    %1378 = vmatpush.msra.mxu0 0.0
    %1379 = vmatpush.msra.mxu0 0.0
    %1380 = vmatpush.msra.mxu0 0.0
    %1381 = vmatpush.msra.mxu0 0.0
    %1382 = vmatpush.msra.mxu0 0.0
    %1383 = vmatpush.msra.mxu0 0.0
    %1384 = vmatpush.msra.mxu0 0.0
    %1385 = vmatpush.msra.mxu0 %v1227
    %1386 = vmatmul.f32.gmra.mxu0 %v1368
    %v1387 = vpop.f32.mrf.mxu0
    %v1388 = vadd.f32 0.0, %v1387
    %1389 = vdwg.mxu0
    %v1391 = vsel %vm750, %v1107, 0
    %1393 = vmatpush.msra.mxu0 0.0
    %1394 = vmatpush.msra.mxu0 0.0
    %1395 = vmatpush.msra.mxu0 0.0
    %1396 = vmatpush.msra.mxu0 0.0
    %1397 = vmatpush.msra.mxu0 0.0
    %1398 = vmatpush.msra.mxu0 0.0
    %1399 = vmatpush.msra.mxu0 0.0
    %1400 = vmatpush.msra.mxu0 0.0
    %1401 = vmatpush.msra.mxu0 0.0
    %1402 = vmatpush.msra.mxu0 0.0
    %1403 = vmatpush.msra.mxu0 0.0
    %1404 = vmatpush.msra.mxu0 0.0
    %1405 = vmatpush.msra.mxu0 0.0
    %1406 = vmatpush.msra.mxu0 0.0
    %1407 = vmatpush.msra.mxu0 0.0
    %1408 = vmatpush.msra.mxu0 %v1228
    %1409 = vmatmul.f32.gmra.mxu0 %v1391
    %v1410 = vpop.f32.mrf.mxu0
    %v1411 = vadd.f32 0.0, %v1410
    %1412 = vdwg.mxu0
    %v1413 = vadd.f32 %v1213, %v1250
    %v1414 = vadd.f32 %v1214, %v1273
    %v1415 = vadd.f32 %v1215, %v1296
    %v1416 = vadd.f32 %v1216, %v1319
    %v1417 = vadd.f32 %v1217, %v1342
    %v1418 = vadd.f32 %v1218, %v1365
    %v1419 = vadd.f32 %v1219, %v1388
    %v1420 = vadd.f32 %v1220, %v1411
    %1421 = vst.msk [vmem:[#allocation4] sm:$0xff] %vm750, %v1413
    %1422 = vst.msk [vmem:[#allocation4 + $0x8] sm:$0xff] %vm750, %v1414
    %1423 = vst.msk [vmem:[#allocation4 + $0x10] sm:$0xff] %vm750, %v1415
    %1424 = vst.msk [vmem:[#allocation4 + $0x18] sm:$0xff] %vm750, %v1416
    %1425 = vst.msk [vmem:[#allocation4 + $0x20] sm:$0xff] %vm750, %v1417
    %1426 = vst.msk [vmem:[#allocation4 + $0x28] sm:$0xff] %vm750, %v1418
    %1427 = vst.msk [vmem:[#allocation4 + $0x30] sm:$0xff] %vm750, %v1419
    %1428 = vst.msk [vmem:[#allocation4 + $0x38] sm:$0xff] %vm750, %v1420
    %1429 = vst.msk [vmem:[#allocation2] sm:$0xff] %vm1156, %v1012
    %1430 = vst.msk [vmem:[#allocation2 + $0x8] sm:$0xff] %vm1156, %v1013
    %1431 = vst.msk [vmem:[#allocation2 + $0x10] sm:$0xff] %vm1156, %v1014
    %1432 = vst.msk [vmem:[#allocation2 + $0x18] sm:$0xff] %vm1156, %v1015
    %1433 = vst.msk [vmem:[#allocation2 + $0x20] sm:$0xff] %vm1156, %v1016
    %1434 = vst.msk [vmem:[#allocation2 + $0x28] sm:$0xff] %vm1156, %v1017
    %1435 = vst.msk [vmem:[#allocation2 + $0x30] sm:$0xff] %vm1156, %v1018
    %1436 = vst.msk [vmem:[#allocation2 + $0x38] sm:$0xff] %vm1156, %v1019
    %v1437 = vld [vmem:[#allocation3] sm:$0xff]
    %v1438 = vld [vmem:[#allocation3 + $0x8] sm:$0xff]
    %v1439 = vld [vmem:[#allocation3 + $0x10] sm:$0xff]
    %v1440 = vld [vmem:[#allocation3 + $0x18] sm:$0xff]
    %v1441 = vld [vmem:[#allocation3 + $0x20] sm:$0xff]
    %v1442 = vld [vmem:[#allocation3 + $0x28] sm:$0xff]
    %v1443 = vld [vmem:[#allocation3 + $0x30] sm:$0xff]
    %v1444 = vld [vmem:[#allocation3 + $0x38] sm:$0xff]
    %v1445 = vrcp.pop %v1437
    %v1446 = vrcp.pop %v1438
    %v1447 = vrcp.pop %v1439
    %v1448 = vrcp.pop %v1440
    %v1449 = vrcp.pop %v1441
    %v1450 = vrcp.pop %v1442
    %v1451 = vrcp.pop %v1443
    %v1452 = vrcp.pop %v1444
    %v1453 = vld [vmem:[#allocation4] sm:$0xff]
    %v1454 = vld [vmem:[#allocation4 + $0x8] sm:$0xff]
    %v1455 = vld [vmem:[#allocation4 + $0x10] sm:$0xff]
    %v1456 = vld [vmem:[#allocation4 + $0x18] sm:$0xff]
    %v1457 = vld [vmem:[#allocation4 + $0x20] sm:$0xff]
    %v1458 = vld [vmem:[#allocation4 + $0x28] sm:$0xff]
    %v1459 = vld [vmem:[#allocation4 + $0x30] sm:$0xff]
    %v1460 = vld [vmem:[#allocation4 + $0x38] sm:$0xff]
    %1462 = vset.pattern.permute.xlu0 0
    %1463 = vperm.xlu0 %1462, %v1445
    %v1464 = vpop.permute.xlu0 %1463
    %1467 = vset.pattern.permute.xlu0 0
    %1468 = vperm.xlu0 %1467, %v1446
    %v1469 = vpop.permute.xlu0 %1468
    %1472 = vset.pattern.permute.xlu0 0
    %1473 = vperm.xlu0 %1472, %v1447
    %v1474 = vpop.permute.xlu0 %1473
    %1477 = vset.pattern.permute.xlu0 0
    %1478 = vperm.xlu0 %1477, %v1448
    %v1479 = vpop.permute.xlu0 %1478
    %1482 = vset.pattern.permute.xlu0 0
    %1483 = vperm.xlu0 %1482, %v1449
    %v1484 = vpop.permute.xlu0 %1483
    %1487 = vset.pattern.permute.xlu0 0
    %1488 = vperm.xlu0 %1487, %v1450
    %v1489 = vpop.permute.xlu0 %1488
    %1492 = vset.pattern.permute.xlu0 0
    %1493 = vperm.xlu0 %1492, %v1451
    %v1494 = vpop.permute.xlu0 %1493
    %1497 = vset.pattern.permute.xlu0 0
    %1498 = vperm.xlu0 %1497, %v1452
    %v1499 = vpop.permute.xlu0 %1498
    %v1501 = vmul.f32 %v1453, %v1464
    %v1502 = vmul.f32 %v1454, %v1469
    %v1503 = vmul.f32 %v1455, %v1474
    %v1504 = vmul.f32 %v1456, %v1479
    %v1505 = vmul.f32 %v1457, %v1484
    %v1506 = vmul.f32 %v1458, %v1489
    %v1507 = vmul.f32 %v1459, %v1494
    %v1508 = vmul.f32 %v1460, %v1499
    %1509 = vst.msk [vmem:[%s3] sm:$0xff] %vm750, %v1501
    %1510 = vst.msk [vmem:[%s3 + $0x8] sm:$0xff] %vm750, %v1502
    %1511 = vst.msk [vmem:[%s3 + $0x10] sm:$0xff] %vm750, %v1503
    %1512 = vst.msk [vmem:[%s3 + $0x18] sm:$0xff] %vm750, %v1504
    %1513 = vst.msk [vmem:[%s3 + $0x20] sm:$0xff] %vm750, %v1505
    %1514 = vst.msk [vmem:[%s3 + $0x28] sm:$0xff] %vm750, %v1506
    %1515 = vst.msk [vmem:[%s3 + $0x30] sm:$0xff] %vm750, %v1507
    %1516 = vst.msk [vmem:[%s3 + $0x38] sm:$0xff] %vm750, %v1508
  $region25: #{block_forward.6} parent=0 // pred_fallthru
    _
  // Predicated region
  $region26: #{block_forward.6} parent=0 // pred_check
    _
  $region27: #{block_forward.6} parent=0 // pred_check_branch
    %1518 = sbr.rel (0) target = $region29
  $region28: #{block_forward.6} parent=0 // pred_region
    _
  $region29: #{block_forward.6} parent=0 // pred_fallthru
    _
  // Predicated region
  $region30: #{block_forward.6} parent=0 // pred_check
    _
  $region31: #{block_forward.6} parent=0 // pred_check_branch
    %1520 = sbr.rel (0) target = $region33
  $region32: #{block_forward.6} parent=0 // pred_region
    _
  $region33: #{block_forward.6} parent=0 // pred_fallthru
    _

</llo_original>
